<compile_context>
chip_gen: v7x
topology: tpu7x:2x2x1
jax: 0.10.0
libtpu: 0.0.40
codegen_flags: <defaults>
</compile_context>

<pallas_src>
import jax
import jax.numpy as jnp
from jax import lax
from jax.experimental import pallas as pl
from jax.experimental.pallas import tpu as pltpu


def gru_encoder_kernel(toks_ref, nlen_ref, emb_ref, h0_ref, wih_ref, whh_ref,
                       bi_ref, bhn_ref, out_ref):
    T_pad, H = out_ref.shape
    n_valid = nlen_ref[0]                                   # real sequence length

    # ---- Bulk embedding gather: table is VMEM-resident, token ids are SMEM
    # scalars; one dynamic row slice per token (T_pad is small & static). ----
    rows = [emb_ref[pl.ds(toks_ref[t], 1), :] for t in range(T_pad)]
    x = jnp.concatenate(rows, axis=0).astype(jnp.bfloat16)  # (T_pad, H)

    # ---- Input projection hoisted out of the recurrence: ONE MXU matmul ----
    gi = jnp.dot(x, wih_ref[...],
                 preferred_element_type=jnp.float32) + bi_ref[...]  # (T_pad, 3H)

    # ---- Serial GRU recurrence, fully unrolled --------------------------------
    whh = whh_ref[...]                                       # (H, 3H) bf16 (resident)
    bhn = bhn_ref[...]                                       # (1, H)  f32
    h = h0_ref[...]                                          # (1, H)  f32
    outs = []
    for t in range(T_pad):
        gh = jnp.dot(h.astype(jnp.bfloat16), whh,
                     preferred_element_type=jnp.float32)     # (1, 3H)
        gi_t = gi[t:t + 1, :]
        r = jax.nn.sigmoid(gi_t[:, :H] + gh[:, :H])
        z = jax.nn.sigmoid(gi_t[:, H:2 * H] + gh[:, H:2 * H])
        c = jnp.tanh(gi_t[:, 2 * H:] + r * (gh[:, 2 * H:] + bhn))
        h_new = c + z * (h - c)                              # == (1-z)*c + z*h
        h = jnp.where(t < n_valid, h_new, h)                 # freeze past seq end
        outs.append(h)

    # ---- One lane/sublane-dense (T_pad, H) store -------------------------------
    out_ref[...] = jnp.concatenate(outs, axis=0).astype(out_ref.dtype)


def encoder_rnn_encode(tokens, hidden0, params):
    """Run the GRU encoder over a whole token sequence with one fused kernel."""
    emb = params["embedding"]                     # (V, H)  f32
    wih_t, whh_t = params["w_ih_t"], params["w_hh_t"]   # (H, 3H) bf16
    b_i, b_hn = params["b_i"], params["b_hn"]            # (1, 3H) / (1, H) f32
    V, H = emb.shape

    tokens = jnp.asarray(tokens, jnp.int32).reshape(-1)
    T = int(tokens.shape[0])
    T_pad = max(8, ((T + 7) // 8) * 8)            # bucket: avoid per-length recompiles
    toks_p = jnp.zeros((T_pad,), jnp.int32).at[:T].set(tokens)
    nlen = jnp.full((1,), T, jnp.int32)
    h0 = hidden0.reshape(1, H).astype(jnp.float32)

    cost = pl.CostEstimate(
        flops=4 * T_pad * H * 3 * H,              # input proj + recurrent matmuls
        transcendentals=T_pad * 3 * H,
        bytes_accessed=(V * H * 4                 # f32 embedding table
                        + 2 * H * 3 * H * 2       # bf16 weight matrices
                        + 4 * H * 4 + H * 4       # biases + h0
                        + T_pad * 4               # tokens
                        + T_pad * H * 4),         # f32 outputs
    )

    vmem = pltpu.MemorySpace.VMEM
    smem = pltpu.MemorySpace.SMEM
    out = pl.pallas_call(
        gru_encoder_kernel,
        out_shape=jax.ShapeDtypeStruct((T_pad, H), jnp.float32),
        in_specs=[
            pl.BlockSpec(memory_space=smem),      # token ids (scalars)
            pl.BlockSpec(memory_space=smem),      # valid length
            pl.BlockSpec(memory_space=vmem),      # embedding table (resident)
            pl.BlockSpec(memory_space=vmem),      # h0
            pl.BlockSpec(memory_space=vmem),      # W_ih^T
            pl.BlockSpec(memory_space=vmem),      # W_hh^T
            pl.BlockSpec(memory_space=vmem),      # folded input-side bias
            pl.BlockSpec(memory_space=vmem),      # b_hh_n
        ],
        out_specs=pl.BlockSpec(memory_space=vmem),
        cost_estimate=cost,
    )(toks_p, nlen, emb, h0, wih_t, whh_t, b_i, b_hn)

    outputs = out[:T].reshape(T, 1, H)            # per-step GRU outputs h_t
    h_final = out[T - 1].reshape(1, 1, H)         # final hidden state
    return outputs, h_final


def encoder_rnn_forward(token, hidden, params):
    """Single-token step matching PyTorch EncoderRNN.forward(input, hidden)."""
    tok = jnp.asarray(token, jnp.int32).reshape(1)
    outputs, h_new = encoder_rnn_encode(tok, hidden, params)
    # PyTorch shapes: output (seq=1, batch=1, H), hidden (1, 1, H)
    return outputs.reshape(1, 1, -1), h_new


def init_params(key, input_size, hidden_size):
    """Synthetic parameters with nn.Embedding / nn.GRU shapes."""
    H = hidden_size
    k1, k2, k3, k4, k5 = jax.random.split(key, 5)
    bound = 1.0 / jnp.sqrt(jnp.float32(H))
    emb = jax.random.normal(k1, (input_size, H), jnp.float32)              # N(0,1)
    w_ih = jax.random.uniform(k2, (3 * H, H), jnp.float32, -bound, bound)
    w_hh = jax.random.uniform(k3, (3 * H, H), jnp.float32, -bound, bound)
    b_ih = jax.random.uniform(k4, (3 * H,), jnp.float32, -bound, bound).reshape(1, 3 * H)
    b_hh = jax.random.uniform(k5, (3 * H,), jnp.float32, -bound, bound).reshape(1, 3 * H)
    # Fold b_hh_{r,z} into the input-side bias (kernel optimization); b_hh_n must
    # remain separate because it sits inside the r * (.) term of the GRU.
    b_i = b_ih + jnp.concatenate([b_hh[:, :2 * H], jnp.zeros((1, H), jnp.float32)], axis=1)
    b_hn = b_hh[:, 2 * H:]
    return dict(
        embedding=emb,                            # (V, H)  f32 (gather-friendly)
        w_ih_t=w_ih.T.astype(jnp.bfloat16),       # (H, 3H) bf16
        w_hh_t=w_hh.T.astype(jnp.bfloat16),       # (H, 3H) bf16
        b_ih=b_ih, b_hh=b_hh,                     # originals (for the reference)
        b_i=b_i, b_hn=b_hn,                       # folded (for the kernel)
    )


def reference_encode(tokens, hidden0, params):
    """Pure-JAX reference with PyTorch nn.GRU semantics (same bf16 weights)."""
    emb = params["embedding"]
    w_ih, w_hh = params["w_ih_t"], params["w_hh_t"]
    b_ih, b_hh = params["b_ih"], params["b_hh"]
    H = hidden0.shape[-1]

    def step(h, tok):
        x = emb[tok][None, :].astype(jnp.bfloat16)                  # (1, H)
        gi = jnp.dot(x, w_ih, preferred_element_type=jnp.float32) + b_ih
        gh = jnp.dot(h.astype(jnp.bfloat16), w_hh,
                     preferred_element_type=jnp.float32) + b_hh
        i_r, i_z, i_n = gi[:, :H], gi[:, H:2 * H], gi[:, 2 * H:]
        h_r, h_z, h_n = gh[:, :H], gh[:, H:2 * H], gh[:, 2 * H:]
        r = jax.nn.sigmoid(i_r + h_r)
        z = jax.nn.sigmoid(i_z + h_z)
        n = jnp.tanh(i_n + r * h_n)
        h_new = (1.0 - z) * n + z * h
        return h_new, h_new

    h0 = hidden0.reshape(1, H).astype(jnp.float32)
    toks = jnp.asarray(tokens, jnp.int32).reshape(-1)
    h_final, outs = lax.scan(step, h0, toks)
    return outs, h_final.reshape(1, 1, H)         # (T, 1, H), (1, 1, H)


if __name__ == "__main__":
    VOCAB = 64      # vocab size
    HIDDEN = 128    # lane-aligned hidden size
    SEQ = 8         # fused sequence length (one (8,128) output tile)

    root = jax.random.PRNGKey(0)
    kp, kt = jax.random.split(root)
    params = init_params(kp, VOCAB, HIDDEN)

    tokens = jax.random.randint(kt, (SEQ,), 0, VOCAB, dtype=jnp.int32)
    hidden0 = jnp.zeros((1, 1, HIDDEN), jnp.float32)     # initHidden()

    # Fused whole-sequence encode: single gridless pallas_call.
    outputs, h_final = encoder_rnn_encode(tokens, hidden0, params)
    outputs = jax.block_until_ready(outputs)
    h_final = jax.block_until_ready(h_final)

    ref_outs, ref_h = reference_encode(tokens, hidden0, params)
    assert outputs.shape == (SEQ, 1, HIDDEN) and h_final.shape == (1, 1, HIDDEN)
    assert jnp.allclose(outputs, ref_outs, atol=1e-3, rtol=1e-3)
    assert jnp.allclose(h_final, ref_h, atol=1e-3, rtol=1e-3)

    # Single-token forward() with the original PyTorch signature / shapes
    # (exercises the length-masking path: T=1 padded to the 8-step bucket).
    out1, h1 = encoder_rnn_forward(tokens[0], hidden0, params)
    out1 = jax.block_until_ready(out1)
    h1 = jax.block_until_ready(h1)
    assert out1.shape == (1, 1, HIDDEN) and h1.shape == (1, 1, HIDDEN)
    assert jnp.allclose(out1, ref_outs[:1].reshape(1, 1, HIDDEN), atol=1e-3, rtol=1e-3)
    assert jnp.allclose(h1, ref_outs[0].reshape(1, 1, HIDDEN), atol=1e-3, rtol=1e-3)

    print("KERNEL_OK")
</pallas_src>

<mosaic_0001>
module attributes {stable_mosaic.version = 11 : i64} {
  func.func @gru_encoder_kernel(%arg0: memref<8xi32, #tpu.memory_space<smem>>, %arg1: memref<1xi32, #tpu.memory_space<smem>>, %arg2: memref<64x128xf32, #tpu.memory_space<vmem>>, %arg3: memref<1x128xf32, #tpu.memory_space<vmem>>, %arg4: memref<128x384xbf16, #tpu.memory_space<vmem>>, %arg5: memref<128x384xbf16, #tpu.memory_space<vmem>>, %arg6: memref<1x384xf32, #tpu.memory_space<vmem>>, %arg7: memref<1x128xf32, #tpu.memory_space<vmem>>, %arg8: memref<8x128xf32, #tpu.memory_space<vmem>>) attributes {dimension_semantics = [], scalar_prefetch = 0 : i64, scratch_operands = 0 : i64, tpu.core_type = #tpu.core_type<tc>} {
    %c0 = arith.constant 0 : index
    %0 = memref.load %arg1[%c0] : memref<1xi32, #tpu.memory_space<smem>>
    %c0_0 = arith.constant 0 : index
    %1 = memref.load %arg0[%c0_0] : memref<8xi32, #tpu.memory_space<smem>>
    %2 = arith.index_cast %1 : i32 to index
    %c0_1 = arith.constant 0 : index
    %3 = vector.load %arg2[%2, %c0_1] : memref<64x128xf32, #tpu.memory_space<vmem>>, vector<1x128xf32>
    %c1 = arith.constant 1 : index
    %4 = memref.load %arg0[%c1] : memref<8xi32, #tpu.memory_space<smem>>
    %5 = arith.index_cast %4 : i32 to index
    %c0_2 = arith.constant 0 : index
    %6 = vector.load %arg2[%5, %c0_2] : memref<64x128xf32, #tpu.memory_space<vmem>>, vector<1x128xf32>
    %c2 = arith.constant 2 : index
    %7 = memref.load %arg0[%c2] : memref<8xi32, #tpu.memory_space<smem>>
    %8 = arith.index_cast %7 : i32 to index
    %c0_3 = arith.constant 0 : index
    %9 = vector.load %arg2[%8, %c0_3] : memref<64x128xf32, #tpu.memory_space<vmem>>, vector<1x128xf32>
    %c3 = arith.constant 3 : index
    %10 = memref.load %arg0[%c3] : memref<8xi32, #tpu.memory_space<smem>>
    %11 = arith.index_cast %10 : i32 to index
    %c0_4 = arith.constant 0 : index
    %12 = vector.load %arg2[%11, %c0_4] : memref<64x128xf32, #tpu.memory_space<vmem>>, vector<1x128xf32>
    %c4 = arith.constant 4 : index
    %13 = memref.load %arg0[%c4] : memref<8xi32, #tpu.memory_space<smem>>
    %14 = arith.index_cast %13 : i32 to index
    %c0_5 = arith.constant 0 : index
    %15 = vector.load %arg2[%14, %c0_5] : memref<64x128xf32, #tpu.memory_space<vmem>>, vector<1x128xf32>
    %c5 = arith.constant 5 : index
    %16 = memref.load %arg0[%c5] : memref<8xi32, #tpu.memory_space<smem>>
    %17 = arith.index_cast %16 : i32 to index
    %c0_6 = arith.constant 0 : index
    %18 = vector.load %arg2[%17, %c0_6] : memref<64x128xf32, #tpu.memory_space<vmem>>, vector<1x128xf32>
    %c6 = arith.constant 6 : index
    %19 = memref.load %arg0[%c6] : memref<8xi32, #tpu.memory_space<smem>>
    %20 = arith.index_cast %19 : i32 to index
    %c0_7 = arith.constant 0 : index
    %21 = vector.load %arg2[%20, %c0_7] : memref<64x128xf32, #tpu.memory_space<vmem>>, vector<1x128xf32>
    %c7 = arith.constant 7 : index
    %22 = memref.load %arg0[%c7] : memref<8xi32, #tpu.memory_space<smem>>
    %23 = arith.index_cast %22 : i32 to index
    %c0_8 = arith.constant 0 : index
    %24 = vector.load %arg2[%23, %c0_8] : memref<64x128xf32, #tpu.memory_space<vmem>>, vector<1x128xf32>
    %25 = tpu.concatenate %3, %6, %9, %12, %15, %18, %21, %24 in 0 : vector<1x128xf32>, vector<1x128xf32>, vector<1x128xf32>, vector<1x128xf32>, vector<1x128xf32>, vector<1x128xf32>, vector<1x128xf32>, vector<1x128xf32> -> vector<8x128xf32>
    %26 = arith.truncf %25 : vector<8x128xf32> to vector<8x128xbf16>
    %c0_9 = arith.constant 0 : index
    %c0_10 = arith.constant 0 : index
    %27 = vector.load %arg4[%c0_9, %c0_10] : memref<128x384xbf16, #tpu.memory_space<vmem>>, vector<128x384xbf16>
    %cst = arith.constant dense<0.000000e+00> : vector<8x384xf32>
    %28 = tpu.matmul %26, %27, %cst {dimension_numbers = #tpu.dot_dimension_numbers<[1], [0], [0], [1], [0, 0, 1, 1], [], []>} : vector<8x128xbf16>, vector<128x384xbf16>, vector<8x384xf32> -> vector<8x384xf32>
    %c0_11 = arith.constant 0 : index
    %c0_12 = arith.constant 0 : index
    %29 = vector.load %arg6[%c0_11, %c0_12] : memref<1x384xf32, #tpu.memory_space<vmem>>, vector<1x384xf32>
    %30 = vector.broadcast %29 : vector<1x384xf32> to vector<8x384xf32>
    %31 = arith.addf %28, %30 : vector<8x384xf32>
    %c0_13 = arith.constant 0 : index
    %c0_14 = arith.constant 0 : index
    %32 = vector.load %arg5[%c0_13, %c0_14] : memref<128x384xbf16, #tpu.memory_space<vmem>>, vector<128x384xbf16>
    %c0_15 = arith.constant 0 : index
    %c0_16 = arith.constant 0 : index
    %33 = vector.load %arg7[%c0_15, %c0_16] : memref<1x128xf32, #tpu.memory_space<vmem>>, vector<1x128xf32>
    %c0_17 = arith.constant 0 : index
    %c0_18 = arith.constant 0 : index
    %34 = vector.load %arg3[%c0_17, %c0_18] : memref<1x128xf32, #tpu.memory_space<vmem>>, vector<1x128xf32>
    %35 = arith.truncf %34 : vector<1x128xf32> to vector<1x128xbf16>
    %cst_19 = arith.constant dense<0.000000e+00> : vector<1x384xf32>
    %36 = tpu.matmul %35, %32, %cst_19 {dimension_numbers = #tpu.dot_dimension_numbers<[1], [0], [0], [1], [0, 0, 1, 1], [], []>} : vector<1x128xbf16>, vector<128x384xbf16>, vector<1x384xf32> -> vector<1x384xf32>
    %37 = vector.extract_strided_slice %31 {offsets = [0, 0], sizes = [1, 384], strides = [1, 1]} : vector<8x384xf32> to vector<1x384xf32>
    %38 = vector.extract_strided_slice %37 {offsets = [0, 0], sizes = [1, 128], strides = [1, 1]} : vector<1x384xf32> to vector<1x128xf32>
    %39 = vector.extract_strided_slice %36 {offsets = [0, 0], sizes = [1, 128], strides = [1, 1]} : vector<1x384xf32> to vector<1x128xf32>
    %40 = arith.addf %38, %39 : vector<1x128xf32>
    %41 = arith.negf %40 : vector<1x128xf32>
    %42 = math.exp %41 : vector<1x128xf32>
    %cst_20 = arith.constant 1.000000e+00 : f32
    %43 = vector.broadcast %cst_20 : f32 to vector<1x128xf32>
    %44 = arith.addf %43, %42 : vector<1x128xf32>
    %45 = arith.divf %43, %44 : vector<1x128xf32>
    %46 = vector.extract_strided_slice %37 {offsets = [0, 128], sizes = [1, 128], strides = [1, 1]} : vector<1x384xf32> to vector<1x128xf32>
    %47 = vector.extract_strided_slice %36 {offsets = [0, 128], sizes = [1, 128], strides = [1, 1]} : vector<1x384xf32> to vector<1x128xf32>
    %48 = arith.addf %46, %47 : vector<1x128xf32>
    %49 = arith.negf %48 : vector<1x128xf32>
    %50 = math.exp %49 : vector<1x128xf32>
    %cst_21 = arith.constant 1.000000e+00 : f32
    %51 = vector.broadcast %cst_21 : f32 to vector<1x128xf32>
    %52 = arith.addf %51, %50 : vector<1x128xf32>
    %53 = arith.divf %51, %52 : vector<1x128xf32>
    %54 = vector.extract_strided_slice %37 {offsets = [0, 256], sizes = [1, 128], strides = [1, 1]} : vector<1x384xf32> to vector<1x128xf32>
    %55 = vector.extract_strided_slice %36 {offsets = [0, 256], sizes = [1, 128], strides = [1, 1]} : vector<1x384xf32> to vector<1x128xf32>
    %56 = arith.addf %55, %33 : vector<1x128xf32>
    %57 = arith.mulf %45, %56 : vector<1x128xf32>
    %58 = arith.addf %54, %57 : vector<1x128xf32>
    %59 = math.tanh %58 : vector<1x128xf32>
    %60 = arith.subf %34, %59 : vector<1x128xf32>
    %61 = arith.mulf %53, %60 : vector<1x128xf32>
    %62 = arith.addf %59, %61 : vector<1x128xf32>
    %c0_i32 = arith.constant 0 : i32
    %63 = arith.cmpi sgt, %0, %c0_i32 : i32
    %64 = arith.select %63, %62, %34 : vector<1x128xf32>
    %65 = arith.truncf %64 : vector<1x128xf32> to vector<1x128xbf16>
    %cst_22 = arith.constant dense<0.000000e+00> : vector<1x384xf32>
    %66 = tpu.matmul %65, %32, %cst_22 {dimension_numbers = #tpu.dot_dimension_numbers<[1], [0], [0], [1], [0, 0, 1, 1], [], []>} : vector<1x128xbf16>, vector<128x384xbf16>, vector<1x384xf32> -> vector<1x384xf32>
    %67 = vector.extract_strided_slice %31 {offsets = [1, 0], sizes = [1, 384], strides = [1, 1]} : vector<8x384xf32> to vector<1x384xf32>
    %68 = vector.extract_strided_slice %67 {offsets = [0, 0], sizes = [1, 128], strides = [1, 1]} : vector<1x384xf32> to vector<1x128xf32>
    %69 = vector.extract_strided_slice %66 {offsets = [0, 0], sizes = [1, 128], strides = [1, 1]} : vector<1x384xf32> to vector<1x128xf32>
    %70 = arith.addf %68, %69 : vector<1x128xf32>
    %71 = arith.negf %70 : vector<1x128xf32>
    %72 = math.exp %71 : vector<1x128xf32>
    %cst_23 = arith.constant 1.000000e+00 : f32
    %73 = vector.broadcast %cst_23 : f32 to vector<1x128xf32>
    %74 = arith.addf %73, %72 : vector<1x128xf32>
    %75 = arith.divf %73, %74 : vector<1x128xf32>
    %76 = vector.extract_strided_slice %67 {offsets = [0, 128], sizes = [1, 128], strides = [1, 1]} : vector<1x384xf32> to vector<1x128xf32>
    %77 = vector.extract_strided_slice %66 {offsets = [0, 128], sizes = [1, 128], strides = [1, 1]} : vector<1x384xf32> to vector<1x128xf32>
    %78 = arith.addf %76, %77 : vector<1x128xf32>
    %79 = arith.negf %78 : vector<1x128xf32>
    %80 = math.exp %79 : vector<1x128xf32>
    %cst_24 = arith.constant 1.000000e+00 : f32
    %81 = vector.broadcast %cst_24 : f32 to vector<1x128xf32>
    %82 = arith.addf %81, %80 : vector<1x128xf32>
    %83 = arith.divf %81, %82 : vector<1x128xf32>
    %84 = vector.extract_strided_slice %67 {offsets = [0, 256], sizes = [1, 128], strides = [1, 1]} : vector<1x384xf32> to vector<1x128xf32>
    %85 = vector.extract_strided_slice %66 {offsets = [0, 256], sizes = [1, 128], strides = [1, 1]} : vector<1x384xf32> to vector<1x128xf32>
    %86 = arith.addf %85, %33 : vector<1x128xf32>
    %87 = arith.mulf %75, %86 : vector<1x128xf32>
    %88 = arith.addf %84, %87 : vector<1x128xf32>
    %89 = math.tanh %88 : vector<1x128xf32>
    %90 = arith.subf %64, %89 : vector<1x128xf32>
    %91 = arith.mulf %83, %90 : vector<1x128xf32>
    %92 = arith.addf %89, %91 : vector<1x128xf32>
    %c1_i32 = arith.constant 1 : i32
    %93 = arith.cmpi sgt, %0, %c1_i32 : i32
    %94 = arith.select %93, %92, %64 : vector<1x128xf32>
    %95 = arith.truncf %94 : vector<1x128xf32> to vector<1x128xbf16>
    %cst_25 = arith.constant dense<0.000000e+00> : vector<1x384xf32>
    %96 = tpu.matmul %95, %32, %cst_25 {dimension_numbers = #tpu.dot_dimension_numbers<[1], [0], [0], [1], [0, 0, 1, 1], [], []>} : vector<1x128xbf16>, vector<128x384xbf16>, vector<1x384xf32> -> vector<1x384xf32>
    %97 = vector.extract_strided_slice %31 {offsets = [2, 0], sizes = [1, 384], strides = [1, 1]} : vector<8x384xf32> to vector<1x384xf32>
    %98 = vector.extract_strided_slice %97 {offsets = [0, 0], sizes = [1, 128], strides = [1, 1]} : vector<1x384xf32> to vector<1x128xf32>
    %99 = vector.extract_strided_slice %96 {offsets = [0, 0], sizes = [1, 128], strides = [1, 1]} : vector<1x384xf32> to vector<1x128xf32>
    %100 = arith.addf %98, %99 : vector<1x128xf32>
    %101 = arith.negf %100 : vector<1x128xf32>
    %102 = math.exp %101 : vector<1x128xf32>
    %cst_26 = arith.constant 1.000000e+00 : f32
    %103 = vector.broadcast %cst_26 : f32 to vector<1x128xf32>
    %104 = arith.addf %103, %102 : vector<1x128xf32>
    %105 = arith.divf %103, %104 : vector<1x128xf32>
    %106 = vector.extract_strided_slice %97 {offsets = [0, 128], sizes = [1, 128], strides = [1, 1]} : vector<1x384xf32> to vector<1x128xf32>
    %107 = vector.extract_strided_slice %96 {offsets = [0, 128], sizes = [1, 128], strides = [1, 1]} : vector<1x384xf32> to vector<1x128xf32>
    %108 = arith.addf %106, %107 : vector<1x128xf32>
    %109 = arith.negf %108 : vector<1x128xf32>
    %110 = math.exp %109 : vector<1x128xf32>
    %cst_27 = arith.constant 1.000000e+00 : f32
    %111 = vector.broadcast %cst_27 : f32 to vector<1x128xf32>
    %112 = arith.addf %111, %110 : vector<1x128xf32>
    %113 = arith.divf %111, %112 : vector<1x128xf32>
    %114 = vector.extract_strided_slice %97 {offsets = [0, 256], sizes = [1, 128], strides = [1, 1]} : vector<1x384xf32> to vector<1x128xf32>
    %115 = vector.extract_strided_slice %96 {offsets = [0, 256], sizes = [1, 128], strides = [1, 1]} : vector<1x384xf32> to vector<1x128xf32>
    %116 = arith.addf %115, %33 : vector<1x128xf32>
    %117 = arith.mulf %105, %116 : vector<1x128xf32>
    %118 = arith.addf %114, %117 : vector<1x128xf32>
    %119 = math.tanh %118 : vector<1x128xf32>
    %120 = arith.subf %94, %119 : vector<1x128xf32>
    %121 = arith.mulf %113, %120 : vector<1x128xf32>
    %122 = arith.addf %119, %121 : vector<1x128xf32>
    %c2_i32 = arith.constant 2 : i32
    %123 = arith.cmpi sgt, %0, %c2_i32 : i32
    %124 = arith.select %123, %122, %94 : vector<1x128xf32>
    %125 = arith.truncf %124 : vector<1x128xf32> to vector<1x128xbf16>
    %cst_28 = arith.constant dense<0.000000e+00> : vector<1x384xf32>
    %126 = tpu.matmul %125, %32, %cst_28 {dimension_numbers = #tpu.dot_dimension_numbers<[1], [0], [0], [1], [0, 0, 1, 1], [], []>} : vector<1x128xbf16>, vector<128x384xbf16>, vector<1x384xf32> -> vector<1x384xf32>
    %127 = vector.extract_strided_slice %31 {offsets = [3, 0], sizes = [1, 384], strides = [1, 1]} : vector<8x384xf32> to vector<1x384xf32>
    %128 = vector.extract_strided_slice %127 {offsets = [0, 0], sizes = [1, 128], strides = [1, 1]} : vector<1x384xf32> to vector<1x128xf32>
    %129 = vector.extract_strided_slice %126 {offsets = [0, 0], sizes = [1, 128], strides = [1, 1]} : vector<1x384xf32> to vector<1x128xf32>
    %130 = arith.addf %128, %129 : vector<1x128xf32>
    %131 = arith.negf %130 : vector<1x128xf32>
    %132 = math.exp %131 : vector<1x128xf32>
    %cst_29 = arith.constant 1.000000e+00 : f32
    %133 = vector.broadcast %cst_29 : f32 to vector<1x128xf32>
    %134 = arith.addf %133, %132 : vector<1x128xf32>
    %135 = arith.divf %133, %134 : vector<1x128xf32>
    %136 = vector.extract_strided_slice %127 {offsets = [0, 128], sizes = [1, 128], strides = [1, 1]} : vector<1x384xf32> to vector<1x128xf32>
    %137 = vector.extract_strided_slice %126 {offsets = [0, 128], sizes = [1, 128], strides = [1, 1]} : vector<1x384xf32> to vector<1x128xf32>
    %138 = arith.addf %136, %137 : vector<1x128xf32>
    %139 = arith.negf %138 : vector<1x128xf32>
    %140 = math.exp %139 : vector<1x128xf32>
    %cst_30 = arith.constant 1.000000e+00 : f32
    %141 = vector.broadcast %cst_30 : f32 to vector<1x128xf32>
    %142 = arith.addf %141, %140 : vector<1x128xf32>
    %143 = arith.divf %141, %142 : vector<1x128xf32>
    %144 = vector.extract_strided_slice %127 {offsets = [0, 256], sizes = [1, 128], strides = [1, 1]} : vector<1x384xf32> to vector<1x128xf32>
    %145 = vector.extract_strided_slice %126 {offsets = [0, 256], sizes = [1, 128], strides = [1, 1]} : vector<1x384xf32> to vector<1x128xf32>
    %146 = arith.addf %145, %33 : vector<1x128xf32>
    %147 = arith.mulf %135, %146 : vector<1x128xf32>
    %148 = arith.addf %144, %147 : vector<1x128xf32>
    %149 = math.tanh %148 : vector<1x128xf32>
    %150 = arith.subf %124, %149 : vector<1x128xf32>
    %151 = arith.mulf %143, %150 : vector<1x128xf32>
    %152 = arith.addf %149, %151 : vector<1x128xf32>
    %c3_i32 = arith.constant 3 : i32
    %153 = arith.cmpi sgt, %0, %c3_i32 : i32
    %154 = arith.select %153, %152, %124 : vector<1x128xf32>
    %155 = arith.truncf %154 : vector<1x128xf32> to vector<1x128xbf16>
    %cst_31 = arith.constant dense<0.000000e+00> : vector<1x384xf32>
    %156 = tpu.matmul %155, %32, %cst_31 {dimension_numbers = #tpu.dot_dimension_numbers<[1], [0], [0], [1], [0, 0, 1, 1], [], []>} : vector<1x128xbf16>, vector<128x384xbf16>, vector<1x384xf32> -> vector<1x384xf32>
    %157 = vector.extract_strided_slice %31 {offsets = [4, 0], sizes = [1, 384], strides = [1, 1]} : vector<8x384xf32> to vector<1x384xf32>
    %158 = vector.extract_strided_slice %157 {offsets = [0, 0], sizes = [1, 128], strides = [1, 1]} : vector<1x384xf32> to vector<1x128xf32>
    %159 = vector.extract_strided_slice %156 {offsets = [0, 0], sizes = [1, 128], strides = [1, 1]} : vector<1x384xf32> to vector<1x128xf32>
    %160 = arith.addf %158, %159 : vector<1x128xf32>
    %161 = arith.negf %160 : vector<1x128xf32>
    %162 = math.exp %161 : vector<1x128xf32>
    %cst_32 = arith.constant 1.000000e+00 : f32
    %163 = vector.broadcast %cst_32 : f32 to vector<1x128xf32>
    %164 = arith.addf %163, %162 : vector<1x128xf32>
    %165 = arith.divf %163, %164 : vector<1x128xf32>
    %166 = vector.extract_strided_slice %157 {offsets = [0, 128], sizes = [1, 128], strides = [1, 1]} : vector<1x384xf32> to vector<1x128xf32>
    %167 = vector.extract_strided_slice %156 {offsets = [0, 128], sizes = [1, 128], strides = [1, 1]} : vector<1x384xf32> to vector<1x128xf32>
    %168 = arith.addf %166, %167 : vector<1x128xf32>
    %169 = arith.negf %168 : vector<1x128xf32>
    %170 = math.exp %169 : vector<1x128xf32>
    %cst_33 = arith.constant 1.000000e+00 : f32
    %171 = vector.broadcast %cst_33 : f32 to vector<1x128xf32>
    %172 = arith.addf %171, %170 : vector<1x128xf32>
    %173 = arith.divf %171, %172 : vector<1x128xf32>
    %174 = vector.extract_strided_slice %157 {offsets = [0, 256], sizes = [1, 128], strides = [1, 1]} : vector<1x384xf32> to vector<1x128xf32>
    %175 = vector.extract_strided_slice %156 {offsets = [0, 256], sizes = [1, 128], strides = [1, 1]} : vector<1x384xf32> to vector<1x128xf32>
    %176 = arith.addf %175, %33 : vector<1x128xf32>
    %177 = arith.mulf %165, %176 : vector<1x128xf32>
    %178 = arith.addf %174, %177 : vector<1x128xf32>
    %179 = math.tanh %178 : vector<1x128xf32>
    %180 = arith.subf %154, %179 : vector<1x128xf32>
    %181 = arith.mulf %173, %180 : vector<1x128xf32>
    %182 = arith.addf %179, %181 : vector<1x128xf32>
    %c4_i32 = arith.constant 4 : i32
    %183 = arith.cmpi sgt, %0, %c4_i32 : i32
    %184 = arith.select %183, %182, %154 : vector<1x128xf32>
    %185 = arith.truncf %184 : vector<1x128xf32> to vector<1x128xbf16>
    %cst_34 = arith.constant dense<0.000000e+00> : vector<1x384xf32>
    %186 = tpu.matmul %185, %32, %cst_34 {dimension_numbers = #tpu.dot_dimension_numbers<[1], [0], [0], [1], [0, 0, 1, 1], [], []>} : vector<1x128xbf16>, vector<128x384xbf16>, vector<1x384xf32> -> vector<1x384xf32>
    %187 = vector.extract_strided_slice %31 {offsets = [5, 0], sizes = [1, 384], strides = [1, 1]} : vector<8x384xf32> to vector<1x384xf32>
    %188 = vector.extract_strided_slice %187 {offsets = [0, 0], sizes = [1, 128], strides = [1, 1]} : vector<1x384xf32> to vector<1x128xf32>
    %189 = vector.extract_strided_slice %186 {offsets = [0, 0], sizes = [1, 128], strides = [1, 1]} : vector<1x384xf32> to vector<1x128xf32>
    %190 = arith.addf %188, %189 : vector<1x128xf32>
    %191 = arith.negf %190 : vector<1x128xf32>
    %192 = math.exp %191 : vector<1x128xf32>
    %cst_35 = arith.constant 1.000000e+00 : f32
    %193 = vector.broadcast %cst_35 : f32 to vector<1x128xf32>
    %194 = arith.addf %193, %192 : vector<1x128xf32>
    %195 = arith.divf %193, %194 : vector<1x128xf32>
    %196 = vector.extract_strided_slice %187 {offsets = [0, 128], sizes = [1, 128], strides = [1, 1]} : vector<1x384xf32> to vector<1x128xf32>
    %197 = vector.extract_strided_slice %186 {offsets = [0, 128], sizes = [1, 128], strides = [1, 1]} : vector<1x384xf32> to vector<1x128xf32>
    %198 = arith.addf %196, %197 : vector<1x128xf32>
    %199 = arith.negf %198 : vector<1x128xf32>
    %200 = math.exp %199 : vector<1x128xf32>
    %cst_36 = arith.constant 1.000000e+00 : f32
    %201 = vector.broadcast %cst_36 : f32 to vector<1x128xf32>
    %202 = arith.addf %201, %200 : vector<1x128xf32>
    %203 = arith.divf %201, %202 : vector<1x128xf32>
    %204 = vector.extract_strided_slice %187 {offsets = [0, 256], sizes = [1, 128], strides = [1, 1]} : vector<1x384xf32> to vector<1x128xf32>
    %205 = vector.extract_strided_slice %186 {offsets = [0, 256], sizes = [1, 128], strides = [1, 1]} : vector<1x384xf32> to vector<1x128xf32>
    %206 = arith.addf %205, %33 : vector<1x128xf32>
    %207 = arith.mulf %195, %206 : vector<1x128xf32>
    %208 = arith.addf %204, %207 : vector<1x128xf32>
    %209 = math.tanh %208 : vector<1x128xf32>
    %210 = arith.subf %184, %209 : vector<1x128xf32>
    %211 = arith.mulf %203, %210 : vector<1x128xf32>
    %212 = arith.addf %209, %211 : vector<1x128xf32>
    %c5_i32 = arith.constant 5 : i32
    %213 = arith.cmpi sgt, %0, %c5_i32 : i32
    %214 = arith.select %213, %212, %184 : vector<1x128xf32>
    %215 = arith.truncf %214 : vector<1x128xf32> to vector<1x128xbf16>
    %cst_37 = arith.constant dense<0.000000e+00> : vector<1x384xf32>
    %216 = tpu.matmul %215, %32, %cst_37 {dimension_numbers = #tpu.dot_dimension_numbers<[1], [0], [0], [1], [0, 0, 1, 1], [], []>} : vector<1x128xbf16>, vector<128x384xbf16>, vector<1x384xf32> -> vector<1x384xf32>
    %217 = vector.extract_strided_slice %31 {offsets = [6, 0], sizes = [1, 384], strides = [1, 1]} : vector<8x384xf32> to vector<1x384xf32>
    %218 = vector.extract_strided_slice %217 {offsets = [0, 0], sizes = [1, 128], strides = [1, 1]} : vector<1x384xf32> to vector<1x128xf32>
    %219 = vector.extract_strided_slice %216 {offsets = [0, 0], sizes = [1, 128], strides = [1, 1]} : vector<1x384xf32> to vector<1x128xf32>
    %220 = arith.addf %218, %219 : vector<1x128xf32>
    %221 = arith.negf %220 : vector<1x128xf32>
    %222 = math.exp %221 : vector<1x128xf32>
    %cst_38 = arith.constant 1.000000e+00 : f32
    %223 = vector.broadcast %cst_38 : f32 to vector<1x128xf32>
    %224 = arith.addf %223, %222 : vector<1x128xf32>
    %225 = arith.divf %223, %224 : vector<1x128xf32>
    %226 = vector.extract_strided_slice %217 {offsets = [0, 128], sizes = [1, 128], strides = [1, 1]} : vector<1x384xf32> to vector<1x128xf32>
    %227 = vector.extract_strided_slice %216 {offsets = [0, 128], sizes = [1, 128], strides = [1, 1]} : vector<1x384xf32> to vector<1x128xf32>
    %228 = arith.addf %226, %227 : vector<1x128xf32>
    %229 = arith.negf %228 : vector<1x128xf32>
    %230 = math.exp %229 : vector<1x128xf32>
    %cst_39 = arith.constant 1.000000e+00 : f32
    %231 = vector.broadcast %cst_39 : f32 to vector<1x128xf32>
    %232 = arith.addf %231, %230 : vector<1x128xf32>
    %233 = arith.divf %231, %232 : vector<1x128xf32>
    %234 = vector.extract_strided_slice %217 {offsets = [0, 256], sizes = [1, 128], strides = [1, 1]} : vector<1x384xf32> to vector<1x128xf32>
    %235 = vector.extract_strided_slice %216 {offsets = [0, 256], sizes = [1, 128], strides = [1, 1]} : vector<1x384xf32> to vector<1x128xf32>
    %236 = arith.addf %235, %33 : vector<1x128xf32>
    %237 = arith.mulf %225, %236 : vector<1x128xf32>
    %238 = arith.addf %234, %237 : vector<1x128xf32>
    %239 = math.tanh %238 : vector<1x128xf32>
    %240 = arith.subf %214, %239 : vector<1x128xf32>
    %241 = arith.mulf %233, %240 : vector<1x128xf32>
    %242 = arith.addf %239, %241 : vector<1x128xf32>
    %c6_i32 = arith.constant 6 : i32
    %243 = arith.cmpi sgt, %0, %c6_i32 : i32
    %244 = arith.select %243, %242, %214 : vector<1x128xf32>
    %245 = arith.truncf %244 : vector<1x128xf32> to vector<1x128xbf16>
    %cst_40 = arith.constant dense<0.000000e+00> : vector<1x384xf32>
    %246 = tpu.matmul %245, %32, %cst_40 {dimension_numbers = #tpu.dot_dimension_numbers<[1], [0], [0], [1], [0, 0, 1, 1], [], []>} : vector<1x128xbf16>, vector<128x384xbf16>, vector<1x384xf32> -> vector<1x384xf32>
    %247 = vector.extract_strided_slice %31 {offsets = [7, 0], sizes = [1, 384], strides = [1, 1]} : vector<8x384xf32> to vector<1x384xf32>
    %248 = vector.extract_strided_slice %247 {offsets = [0, 0], sizes = [1, 128], strides = [1, 1]} : vector<1x384xf32> to vector<1x128xf32>
    %249 = vector.extract_strided_slice %246 {offsets = [0, 0], sizes = [1, 128], strides = [1, 1]} : vector<1x384xf32> to vector<1x128xf32>
    %250 = arith.addf %248, %249 : vector<1x128xf32>
    %251 = arith.negf %250 : vector<1x128xf32>
    %252 = math.exp %251 : vector<1x128xf32>
    %cst_41 = arith.constant 1.000000e+00 : f32
    %253 = vector.broadcast %cst_41 : f32 to vector<1x128xf32>
    %254 = arith.addf %253, %252 : vector<1x128xf32>
    %255 = arith.divf %253, %254 : vector<1x128xf32>
    %256 = vector.extract_strided_slice %247 {offsets = [0, 128], sizes = [1, 128], strides = [1, 1]} : vector<1x384xf32> to vector<1x128xf32>
    %257 = vector.extract_strided_slice %246 {offsets = [0, 128], sizes = [1, 128], strides = [1, 1]} : vector<1x384xf32> to vector<1x128xf32>
    %258 = arith.addf %256, %257 : vector<1x128xf32>
    %259 = arith.negf %258 : vector<1x128xf32>
    %260 = math.exp %259 : vector<1x128xf32>
    %cst_42 = arith.constant 1.000000e+00 : f32
    %261 = vector.broadcast %cst_42 : f32 to vector<1x128xf32>
    %262 = arith.addf %261, %260 : vector<1x128xf32>
    %263 = arith.divf %261, %262 : vector<1x128xf32>
    %264 = vector.extract_strided_slice %247 {offsets = [0, 256], sizes = [1, 128], strides = [1, 1]} : vector<1x384xf32> to vector<1x128xf32>
    %265 = vector.extract_strided_slice %246 {offsets = [0, 256], sizes = [1, 128], strides = [1, 1]} : vector<1x384xf32> to vector<1x128xf32>
    %266 = arith.addf %265, %33 : vector<1x128xf32>
    %267 = arith.mulf %255, %266 : vector<1x128xf32>
    %268 = arith.addf %264, %267 : vector<1x128xf32>
    %269 = math.tanh %268 : vector<1x128xf32>
    %270 = arith.subf %244, %269 : vector<1x128xf32>
    %271 = arith.mulf %263, %270 : vector<1x128xf32>
    %272 = arith.addf %269, %271 : vector<1x128xf32>
    %c7_i32 = arith.constant 7 : i32
    %273 = arith.cmpi sgt, %0, %c7_i32 : i32
    %274 = arith.select %273, %272, %244 : vector<1x128xf32>
    %275 = tpu.concatenate %64, %94, %124, %154, %184, %214, %244, %274 in 0 : vector<1x128xf32>, vector<1x128xf32>, vector<1x128xf32>, vector<1x128xf32>, vector<1x128xf32>, vector<1x128xf32>, vector<1x128xf32>, vector<1x128xf32> -> vector<8x128xf32>
    %c0_43 = arith.constant 0 : index
    %c0_44 = arith.constant 0 : index
    %276 = vector.load %arg8[%c0_43, %c0_44] : memref<8x128xf32, #tpu.memory_space<vmem>>, vector<8x128xf32>
    tpu.vector_store %arg8[%c0_43, %c0_44], %275 {strides = array<i32>} : memref<8x128xf32, #tpu.memory_space<vmem>>, vector<8x128xf32>,
    return
  }
}

</mosaic_0001>

<llo_original>
// kernel: tpu_custom_call.1
$region0: #{tpu_custom_call.1}
  #allocation0 [shape = 'u32[]', space=smem, size = 0x4, offset = 0x4, fixed_abs, tag = 'smem constant byte address 0x4 - core index']
  #allocation1 [shape = 'u32[144,128]{1,0:T(1,128)}', space=vmem, size = 0x12000, scoped, tag = 'internal scratch']
  #allocation2 [shape = 's32[1]{0:T(128)S(6)}', space=smem, size = 0x200, scoped, tag = 'scoped memory for tpu_custom_call.1']
  %s0 = inlined_call_operand.vmem [shape: s32[8], index: 0, kind: input, shape index: {}]
  %s1 = inlined_call_operand.<no memory space> [shape: s32[1], index: 1, kind: input, shape index: {}]
  %s2 = inlined_call_operand.hbm [shape: f32[64,128], index: 2, kind: input, shape index: {}]
  %s3 = inlined_call_operand.vmem [shape: f32[1,128], index: 3, kind: input, shape index: {}]
  %s4 = inlined_call_operand.hbm [shape: bf16[128,384], index: 4, kind: input, shape index: {}]
  %s5 = inlined_call_operand.hbm [shape: bf16[128,384], index: 5, kind: input, shape index: {}]
  %s6 = inlined_call_operand.vmem [shape: f32[1,384], index: 6, kind: input, shape index: {}]
  %s7 = inlined_call_operand.vmem [shape: f32[1,128], index: 7, kind: input, shape index: {}]
  %s8 = inlined_call_operand.hbm [shape: f32[8,128], index: 8, kind: output, shape index: {}]
  %s9 = sld [smem:[#allocation0]]
  $region58: #{tpu_custom_call.1} parent=0
    _
  %s11 = ssub.s32 1, %s9
  %s12 = scalar_select 0, %s11, %s9
  %13 = sst [smem:[#allocation2]] %s1
  $region1: #{tpu_custom_call.1} parent=0
    #allocation3 [shape = 'u8[512]{0}', space=smem, size = 0x200, scoped, tag = 'input window, operand 0, single buffered']
    #allocation4 [shape = 's32[1]{0}', space=sflag, size = 0x4, scoped, tag = 'scoped memory for tpu_custom_call.1']
    #allocation5 [shape = 's32[1]{0}', space=sflag, size = 0x4, scoped, tag = 'scoped memory for tpu_custom_call.1']
    #allocation6 [shape = 's32[1]{0}', space=sflag, size = 0x4, scoped, tag = 'scoped memory for tpu_custom_call.1']
    #allocation7 [shape = 'u8[32768]{0}', space=vmem, size = 0x8000, scoped, tag = 'input window, operand 2, single buffered']
    #allocation8 [shape = 'u8[98304]{0}', space=vmem, size = 0x18000, scoped, tag = 'input window, operand 4, single buffered']
    #allocation9 [shape = 's32[1]{0}', space=sflag, size = 0x4, scoped, tag = 'scoped memory for tpu_custom_call.1']
    #allocation10 [shape = 'u8[98304]{0}', space=vmem, size = 0x18000, scoped, tag = 'input window, operand 5, single buffered']
    #allocation11 [shape = 'u8[4096]{0}', space=vmem, size = 0x1000, scoped, tag = 'output window, operand 0, single buffered']
    %14 = vsyncpa [#allocation6], 0
    %15 = vsyncpa [#allocation4], 0
    %16 = vsyncpa [#allocation9], 0
    %17 = vsyncpa [#allocation5], 0
    // Predicated region
    $region2: #{tpu_custom_call.1} parent=1 // pred_check
      _
    $region3: #{tpu_custom_call.1} parent=1 // pred_check_branch
      %19 = sbr.rel (0) target = $region5
    $region4: #{tpu_custom_call.1} parent=1 // pred_region
      %s21 = ssub.s32 16, 16
      %22 = vsyncadd [#allocation6], %s21
      %s24 = sshll.u32 %s0, 4
      %s25 = int_to_ptr.vmem [resolvable:$true] %s24
      %27 = dma.vmem_to_smem %s25, 16, [#allocation3], [#allocation6]
    $region5: #{tpu_custom_call.1} parent=1 // pred_fallthru
      _
    // Predicated region
    $region6: #{tpu_custom_call.1} parent=1 // pred_check
      _
    $region7: #{tpu_custom_call.1} parent=1 // pred_check_branch
      %29 = sbr.rel (0) target = $region9
    $region8: #{tpu_custom_call.1} parent=1 // pred_region
      _
    $region9: #{tpu_custom_call.1} parent=1 // pred_fallthru
      _
    // Predicated region
    $region10: #{tpu_custom_call.1} parent=1 // pred_check
      _
    $region11: #{tpu_custom_call.1} parent=1 // pred_check_branch
      %31 = sbr.rel (0) target = $region13
    $region12: #{tpu_custom_call.1} parent=1 // pred_region
      %s33 = ssub.s32 1024, 1024
      %34 = vsyncadd [#allocation4], %s33
      %s35 = sshll.u32 [#allocation7], 4
      %s36 = int_to_ptr.vmem [resolvable:$true] %s35
      %41 = dma.hbm_to_vmem [thread:$0]  %s2, 1024, %s36, [#allocation4], 128, 128, 8
    $region13: #{tpu_custom_call.1} parent=1 // pred_fallthru
      _
    // Predicated region
    $region14: #{tpu_custom_call.1} parent=1 // pred_check
      _
    $region15: #{tpu_custom_call.1} parent=1 // pred_check_branch
      %43 = sbr.rel (0) target = $region17
    $region16: #{tpu_custom_call.1} parent=1 // pred_region
      _
    $region17: #{tpu_custom_call.1} parent=1 // pred_fallthru
      _
    // Predicated region
    $region18: #{tpu_custom_call.1} parent=1 // pred_check
      _
    $region19: #{tpu_custom_call.1} parent=1 // pred_check_branch
      %45 = sbr.rel (0) target = $region21
    $region20: #{tpu_custom_call.1} parent=1 // pred_region
      %s47 = ssub.s32 3072, 3072
      %48 = vsyncadd [#allocation9], %s47
      %s49 = sshll.u32 [#allocation8], 4
      %s50 = int_to_ptr.vmem [resolvable:$true] %s49
      %55 = dma.hbm_to_vmem [thread:$0]  %s4, 3072, %s50, [#allocation9], 192, 192, 12
    $region21: #{tpu_custom_call.1} parent=1 // pred_fallthru
      _
    // Predicated region
    $region22: #{tpu_custom_call.1} parent=1 // pred_check
      _
    $region23: #{tpu_custom_call.1} parent=1 // pred_check_branch
      %57 = sbr.rel (0) target = $region25
    $region24: #{tpu_custom_call.1} parent=1 // pred_region
      %s59 = ssub.s32 3072, 3072
      %60 = vsyncadd [#allocation9], %s59
      %s61 = sshll.u32 [#allocation10], 4
      %s62 = int_to_ptr.vmem [resolvable:$true] %s61
      %67 = dma.hbm_to_vmem [thread:$0]  %s5, 3072, %s62, [#allocation9], 192, 192, 12
    $region25: #{tpu_custom_call.1} parent=1 // pred_fallthru
      _
    // Predicated region
    $region26: #{tpu_custom_call.1} parent=1 // pred_check
      _
    $region27: #{tpu_custom_call.1} parent=1 // pred_check_branch
      %69 = sbr.rel (0) target = $region29
    $region28: #{tpu_custom_call.1} parent=1 // pred_region
      _
    $region29: #{tpu_custom_call.1} parent=1 // pred_fallthru
      _
    // Predicated region
    $region30: #{tpu_custom_call.1} parent=1 // pred_check
      _
    $region31: #{tpu_custom_call.1} parent=1 // pred_check_branch
      %71 = sbr.rel (0) target = $region33
    $region32: #{tpu_custom_call.1} parent=1 // pred_region
      _
    $region33: #{tpu_custom_call.1} parent=1 // pred_fallthru
      _
    // Predicated region
    $region34: #{tpu_custom_call.1} parent=1 // pred_check
      _
    $region35: #{tpu_custom_call.1} parent=1 // pred_check_branch
      %73 = sbr.rel (0) target = $region37
    $region36: #{tpu_custom_call.1} parent=1 // pred_region
      %74 = dma.done [#allocation6], 16
    $region37: #{tpu_custom_call.1} parent=1 // pred_fallthru
      _
    // Predicated region
    $region38: #{tpu_custom_call.1} parent=1 // pred_check
      _
    $region39: #{tpu_custom_call.1} parent=1 // pred_check_branch
      %76 = sbr.rel (0) target = $region41
    $region40: #{tpu_custom_call.1} parent=1 // pred_region
      %77 = dma.done [#allocation4], 1024
    $region41: #{tpu_custom_call.1} parent=1 // pred_fallthru
      _
    // Predicated region
    $region42: #{tpu_custom_call.1} parent=1 // pred_check
      _
    $region43: #{tpu_custom_call.1} parent=1 // pred_check_branch
      %79 = sbr.rel (0) target = $region45
    $region44: #{tpu_custom_call.1} parent=1 // pred_region
      %80 = dma.done [#allocation9], 3072
    $region45: #{tpu_custom_call.1} parent=1 // pred_fallthru
      _
    // Predicated region
    $region46: #{tpu_custom_call.1} parent=1 // pred_check
      _
    $region47: #{tpu_custom_call.1} parent=1 // pred_check_branch
      %82 = sbr.rel (0) target = $region49
    $region48: #{tpu_custom_call.1} parent=1 // pred_region
      %83 = dma.done [#allocation9], 3072
    $region49: #{tpu_custom_call.1} parent=1 // pred_fallthru
      _
    %84 = sfence
    %s86 = sld [smem:[#allocation2]]
    %s87 = sld [smem:[#allocation3]]
    %s88 = scalar_lea.vmem [#allocation7], %s87
    %v89 = vld [vmem:[%s88] sm:$0x1]
    %s90 = sld [smem:[#allocation3 + $0x1]]
    %s91 = scalar_lea.vmem [#allocation7], %s90
    %v92 = vld [vmem:[%s91] sm:$0x1]
    %s93 = sld [smem:[#allocation3 + $0x2]]
    %s94 = scalar_lea.vmem [#allocation7], %s93
    %v95 = vld [vmem:[%s94] sm:$0x1]
    %s96 = sld [smem:[#allocation3 + $0x3]]
    %s97 = scalar_lea.vmem [#allocation7], %s96
    %v98 = vld [vmem:[%s97] sm:$0x1]
    %s99 = sld [smem:[#allocation3 + $0x4]]
    %s100 = scalar_lea.vmem [#allocation7], %s99
    %v101 = vld [vmem:[%s100] sm:$0x1]
    %s102 = sld [smem:[#allocation3 + $0x5]]
    %s103 = scalar_lea.vmem [#allocation7], %s102
    %v104 = vld [vmem:[%s103] sm:$0x1]
    %s105 = sld [smem:[#allocation3 + $0x6]]
    %s106 = scalar_lea.vmem [#allocation7], %s105
    %v107 = vld [vmem:[%s106] sm:$0x1]
    %s108 = sld [smem:[#allocation3 + $0x7]]
    %s109 = scalar_lea.vmem [#allocation7], %s108
    %v110 = vld [vmem:[%s109] sm:$0x1]
    %v112 = vrot.slane %v92, 7
    %v115 = vrot.slane %v95, 6
    %v118 = vrot.slane %v98, 5
    %v121 = vrot.slane %v101, 4
    %v124 = vrot.slane %v104, 3
    %v127 = vrot.slane %v107, 2
    %v130 = vrot.slane %v110, 1
    %vm132 = vcmask 1040384
    %v133 = vsel %vm132, %v89, %v112
    %vm134 = vcmask 1041408
    %v135 = vsel %vm134, %v133, %v115
    %vm136 = vcmask 1042432
    %v137 = vsel %vm136, %v135, %v118
    %vm138 = vcmask 1043456
    %v139 = vsel %vm138, %v137, %v121
    %vm140 = vcmask 1044480
    %v141 = vsel %vm140, %v139, %v124
    %vm142 = vcmask 1045504
    %v143 = vsel %vm142, %v141, %v127
    %vm144 = vcmask 1046528
    %v145 = vsel %vm144, %v143, %v130
    %v146 = vpack.c.bf16 %v145, %v145
    %v147 = vld [vmem:[#allocation8] sm:$0xff]
    %v148 = vld [vmem:[#allocation8 + $0x8] sm:$0xf]
    %v149 = vld [vmem:[#allocation8 + $0xc] sm:$0xff]
    %v150 = vld [vmem:[#allocation8 + $0x14] sm:$0xf]
    %v151 = vld [vmem:[#allocation8 + $0x18] sm:$0xff]
    %v152 = vld [vmem:[#allocation8 + $0x20] sm:$0xf]
    %v153 = vld [vmem:[#allocation8 + $0x24] sm:$0xff]
    %v154 = vld [vmem:[#allocation8 + $0x2c] sm:$0xf]
    %v155 = vld [vmem:[#allocation8 + $0x30] sm:$0xff]
    %v156 = vld [vmem:[#allocation8 + $0x38] sm:$0xf]
    %v157 = vld [vmem:[#allocation8 + $0x3c] sm:$0xff]
    %v158 = vld [vmem:[#allocation8 + $0x44] sm:$0xf]
    %v159 = vld [vmem:[#allocation8 + $0x48] sm:$0xff]
    %v160 = vld [vmem:[#allocation8 + $0x50] sm:$0xf]
    %v161 = vld [vmem:[#allocation8 + $0x54] sm:$0xff]
    %v162 = vld [vmem:[#allocation8 + $0x5c] sm:$0xf]
    %v163 = vld [vmem:[#allocation8 + $0x60] sm:$0xff]
    %v164 = vld [vmem:[#allocation8 + $0x68] sm:$0xf]
    %v165 = vld [vmem:[#allocation8 + $0x6c] sm:$0xff]
    %v166 = vld [vmem:[#allocation8 + $0x74] sm:$0xf]
    %v167 = vld [vmem:[#allocation8 + $0x78] sm:$0xff]
    %v168 = vld [vmem:[#allocation8 + $0x80] sm:$0xf]
    %v169 = vld [vmem:[#allocation8 + $0x84] sm:$0xff]
    %v170 = vld [vmem:[#allocation8 + $0x8c] sm:$0xf]
    %v171 = vld [vmem:[#allocation8 + $0x90] sm:$0xff]
    %v172 = vld [vmem:[#allocation8 + $0x98] sm:$0xf]
    %v173 = vld [vmem:[#allocation8 + $0x9c] sm:$0xff]
    %v174 = vld [vmem:[#allocation8 + $0xa4] sm:$0xf]
    %v175 = vld [vmem:[#allocation8 + $0xa8] sm:$0xff]
    %v176 = vld [vmem:[#allocation8 + $0xb0] sm:$0xf]
    %v177 = vld [vmem:[#allocation8 + $0xb4] sm:$0xff]
    %v178 = vld [vmem:[#allocation8 + $0xbc] sm:$0xf]
    %v179 = vld [vmem:[%s6] sm:$0x7]
    %v181 = vlaneseq
    %v182 = vshrl.u32 %v181, 7
    %v183 = vsub.s32 0, %v182
    %v184 = vrot.slane %v179, %v183
    %v185 = vlaneseq
    %v186 = vshrl.u32 %v185, 7
    %v187 = vsub.s32 1, %v186
    %v188 = vrot.slane %v179, %v187
    %v189 = vlaneseq
    %v190 = vshrl.u32 %v189, 7
    %v191 = vsub.s32 2, %v190
    %v192 = vrot.slane %v179, %v191
    %v228 = vunpack.c.l.b16 %v147
    %v229 = vunpack.c.h.b16 %v147
    %v230 = vunpack.c.l.b16 %v148
    %v231 = vunpack.c.l.b16 %v149
    %v232 = vunpack.c.h.b16 %v149
    %v233 = vunpack.c.l.b16 %v150
    %v234 = vunpack.c.l.b16 %v151
    %v235 = vunpack.c.h.b16 %v151
    %v236 = vunpack.c.l.b16 %v152
    %v237 = vunpack.c.l.b16 %v153
    %v238 = vunpack.c.h.b16 %v153
    %v239 = vunpack.c.l.b16 %v154
    %v240 = vunpack.c.l.b16 %v155
    %v241 = vunpack.c.h.b16 %v155
    %v242 = vunpack.c.l.b16 %v156
    %v243 = vunpack.c.l.b16 %v157
    %v244 = vunpack.c.h.b16 %v157
    %v245 = vunpack.c.l.b16 %v158
    %v246 = vunpack.c.l.b16 %v159
    %v247 = vunpack.c.h.b16 %v159
    %v248 = vunpack.c.l.b16 %v160
    %v249 = vunpack.c.l.b16 %v161
    %v250 = vunpack.c.h.b16 %v161
    %v251 = vunpack.c.l.b16 %v162
    %v252 = vunpack.c.l.b16 %v163
    %v253 = vunpack.c.h.b16 %v163
    %v254 = vunpack.c.l.b16 %v164
    %v255 = vunpack.c.l.b16 %v165
    %v256 = vunpack.c.h.b16 %v165
    %v257 = vunpack.c.l.b16 %v166
    %v258 = vunpack.c.l.b16 %v167
    %v259 = vunpack.c.h.b16 %v167
    %v260 = vunpack.c.l.b16 %v168
    %v261 = vunpack.c.l.b16 %v169
    %v262 = vunpack.c.h.b16 %v169
    %v263 = vunpack.c.l.b16 %v170
    %v264 = vunpack.c.l.b16 %v171
    %v265 = vunpack.c.h.b16 %v171
    %v266 = vunpack.c.l.b16 %v172
    %v267 = vunpack.c.l.b16 %v173
    %v268 = vunpack.c.h.b16 %v173
    %v269 = vunpack.c.l.b16 %v174
    %v270 = vunpack.c.l.b16 %v175
    %v271 = vunpack.c.h.b16 %v175
    %v272 = vunpack.c.l.b16 %v176
    %v273 = vunpack.c.l.b16 %v177
    %v274 = vunpack.c.h.b16 %v177
    %v275 = vunpack.c.l.b16 %v178
    %v276 = vpack.c.b16 %v231, %v228
    %v277 = vpack.c.b16 %v232, %v229
    %v278 = vpack.c.b16 %v233, %v230
    %v279 = vpack.c.b16 %v237, %v234
    %v280 = vpack.c.b16 %v238, %v235
    %v281 = vpack.c.b16 %v239, %v236
    %v282 = vpack.c.b16 %v243, %v240
    %v283 = vpack.c.b16 %v244, %v241
    %v284 = vpack.c.b16 %v245, %v242
    %v285 = vpack.c.b16 %v249, %v246
    %v286 = vpack.c.b16 %v250, %v247
    %v287 = vpack.c.b16 %v251, %v248
    %v288 = vpack.c.b16 %v255, %v252
    %v289 = vpack.c.b16 %v256, %v253
    %v290 = vpack.c.b16 %v257, %v254
    %v291 = vpack.c.b16 %v261, %v258
    %v292 = vpack.c.b16 %v262, %v259
    %v293 = vpack.c.b16 %v263, %v260
    %v294 = vpack.c.b16 %v267, %v264
    %v295 = vpack.c.b16 %v268, %v265
    %v296 = vpack.c.b16 %v269, %v266
    %v297 = vpack.c.b16 %v273, %v270
    %v298 = vpack.c.b16 %v274, %v271
    %v299 = vpack.c.b16 %v275, %v272
    %324 = vmatprep.subr.bf16.mxu0 %v277
    %325 = vmatpush1.bf16.msra.mxu0 %v276
    %326 = vmatprep.subr.bf16.mxu0 %v280
    %327 = vmatpush1.bf16.msra.mxu0 %v279
    %328 = vmatprep.subr.bf16.mxu0 %v283
    %329 = vmatpush1.bf16.msra.mxu0 %v282
    %330 = vmatprep.subr.bf16.mxu0 %v286
    %331 = vmatpush1.bf16.msra.mxu0 %v285
    %332 = vmatprep.subr.bf16.mxu0 %v289
    %333 = vmatpush1.bf16.msra.mxu0 %v288
    %334 = vmatprep.subr.bf16.mxu0 %v292
    %335 = vmatpush1.bf16.msra.mxu0 %v291
    %336 = vmatprep.subr.bf16.mxu0 %v295
    %337 = vmatpush1.bf16.msra.mxu0 %v294
    %338 = vmatprep.subr.bf16.mxu0 %v298
    %339 = vmatpush1.bf16.msra.mxu0 %v297
    %340 = vmatprep.subr.bf16.mxu0 0
    %341 = vmatpush1.bf16.msra.mxu0 0
    %342 = vmatprep.subr.bf16.mxu0 0
    %343 = vmatpush1.bf16.msra.mxu0 0
    %344 = vmatprep.subr.bf16.mxu0 0
    %345 = vmatpush1.bf16.msra.mxu0 0
    %346 = vmatprep.subr.bf16.mxu0 0
    %347 = vmatpush1.bf16.msra.mxu0 0
    %348 = vmatprep.subr.bf16.mxu0 0
    %349 = vmatpush1.bf16.msra.mxu0 0
    %350 = vmatprep.subr.bf16.mxu0 0
    %351 = vmatpush1.bf16.msra.mxu0 0
    %352 = vmatprep.subr.bf16.mxu0 0
    %353 = vmatpush1.bf16.msra.mxu0 0
    %354 = vmatprep.subr.bf16.mxu0 0
    %355 = vmatpush1.bf16.msra.mxu0 0
    %356 = vmatprep.mubr.bf16.mxu0 0
    %357 = vmatmul.mubr.bf16.gmra.mrb[0].mxu0 %v146
    %v358 = vpop.f32.mrb[0].mxu0
    %v359 = vadd.f32 %v184, %v358
    %v360 = vpop.f32.mrb[0].mxu0
    %v361 = vadd.f32 %v188, %v360
    %v362 = vpop.f32.mrb[0].mxu0
    %v363 = vpop.f32.mrb[0].mxu0
    %364 = vdwg.mxu0
    %365 = vmatprep.subr.bf16.mxu0 0
    %366 = vmatpush1.bf16.msra.mxu0 %v278
    %367 = vmatprep.subr.bf16.mxu0 0
    %368 = vmatpush1.bf16.msra.mxu0 %v281
    %369 = vmatprep.subr.bf16.mxu0 0
    %370 = vmatpush1.bf16.msra.mxu0 %v284
    %371 = vmatprep.subr.bf16.mxu0 0
    %372 = vmatpush1.bf16.msra.mxu0 %v287
    %373 = vmatprep.subr.bf16.mxu0 0
    %374 = vmatpush1.bf16.msra.mxu0 %v290
    %375 = vmatprep.subr.bf16.mxu0 0
    %376 = vmatpush1.bf16.msra.mxu0 %v293
    %377 = vmatprep.subr.bf16.mxu0 0
    %378 = vmatpush1.bf16.msra.mxu0 %v296
    %379 = vmatprep.subr.bf16.mxu0 0
    %380 = vmatpush1.bf16.msra.mxu0 %v299
    %381 = vmatprep.subr.bf16.mxu0 0
    %382 = vmatpush1.bf16.msra.mxu0 0
    %383 = vmatprep.subr.bf16.mxu0 0
    %384 = vmatpush1.bf16.msra.mxu0 0
    %385 = vmatprep.subr.bf16.mxu0 0
    %386 = vmatpush1.bf16.msra.mxu0 0
    %387 = vmatprep.subr.bf16.mxu0 0
    %388 = vmatpush1.bf16.msra.mxu0 0
    %389 = vmatprep.subr.bf16.mxu0 0
    %390 = vmatpush1.bf16.msra.mxu0 0
    %391 = vmatprep.subr.bf16.mxu0 0
    %392 = vmatpush1.bf16.msra.mxu0 0
    %393 = vmatprep.subr.bf16.mxu0 0
    %394 = vmatpush1.bf16.msra.mxu0 0
    %395 = vmatprep.subr.bf16.mxu0 0
    %396 = vmatpush1.bf16.msra.mxu0 0
    %397 = vmatprep.mubr.bf16.mxu0 0
    %398 = vmatmul.mubr.bf16.gmra.mrb[0].mxu0 %v146
    %v399 = vpop.f32.mrb[0].mxu0
    %v400 = vadd.f32 %v192, %v399
    %v401 = vpop.f32.mrb[0].mxu0
    %v402 = vpop.f32.mrb[0].mxu0
    %v403 = vpop.f32.mrb[0].mxu0
    %404 = vdwg.mxu0
    %v405 = vld [vmem:[#allocation10] sm:$0xff]
    %v406 = vld [vmem:[#allocation10 + $0x8] sm:$0xf]
    %v407 = vld [vmem:[#allocation10 + $0xc] sm:$0xff]
    %v408 = vld [vmem:[#allocation10 + $0x14] sm:$0xf]
    %v409 = vld [vmem:[#allocation10 + $0x18] sm:$0xff]
    %v410 = vld [vmem:[#allocation10 + $0x20] sm:$0xf]
    %v411 = vld [vmem:[#allocation10 + $0x24] sm:$0xff]
    %v412 = vld [vmem:[#allocation10 + $0x2c] sm:$0xf]
    %v413 = vld [vmem:[#allocation10 + $0x30] sm:$0xff]
    %v414 = vld [vmem:[#allocation10 + $0x38] sm:$0xf]
    %v415 = vld [vmem:[#allocation10 + $0x3c] sm:$0xff]
    %v416 = vld [vmem:[#allocation10 + $0x44] sm:$0xf]
    %v417 = vld [vmem:[#allocation10 + $0x48] sm:$0xff]
    %v418 = vld [vmem:[#allocation10 + $0x50] sm:$0xf]
    %v419 = vld [vmem:[#allocation10 + $0x54] sm:$0xff]
    %v420 = vld [vmem:[#allocation10 + $0x5c] sm:$0xf]
    %v421 = vld [vmem:[#allocation10 + $0x60] sm:$0xff]
    %v422 = vld [vmem:[#allocation10 + $0x68] sm:$0xf]
    %v423 = vld [vmem:[#allocation10 + $0x6c] sm:$0xff]
    %v424 = vld [vmem:[#allocation10 + $0x74] sm:$0xf]
    %v425 = vld [vmem:[#allocation10 + $0x78] sm:$0xff]
    %v426 = vld [vmem:[#allocation10 + $0x80] sm:$0xf]
    %v427 = vld [vmem:[#allocation10 + $0x84] sm:$0xff]
    %v428 = vld [vmem:[#allocation10 + $0x8c] sm:$0xf]
    %v429 = vld [vmem:[#allocation10 + $0x90] sm:$0xff]
    %v430 = vld [vmem:[#allocation10 + $0x98] sm:$0xf]
    %v431 = vld [vmem:[#allocation10 + $0x9c] sm:$0xff]
    %v432 = vld [vmem:[#allocation10 + $0xa4] sm:$0xf]
    %v433 = vld [vmem:[#allocation10 + $0xa8] sm:$0xff]
    %v434 = vld [vmem:[#allocation10 + $0xb0] sm:$0xf]
    %v435 = vld [vmem:[#allocation10 + $0xb4] sm:$0xff]
    %v436 = vld [vmem:[#allocation10 + $0xbc] sm:$0xf]
    %v437 = vld [vmem:[%s7] sm:$0x1]
    %v438 = vld [vmem:[%s3] sm:$0x1]
    %v439 = vpack.c.bf16 %v438, %v438
    %v472 = vunpack.c.l.b16 %v405
    %v473 = vunpack.c.h.b16 %v405
    %v474 = vunpack.c.l.b16 %v406
    %v475 = vunpack.c.l.b16 %v407
    %v476 = vunpack.c.h.b16 %v407
    %v477 = vunpack.c.l.b16 %v408
    %v478 = vunpack.c.l.b16 %v409
    %v479 = vunpack.c.h.b16 %v409
    %v480 = vunpack.c.l.b16 %v410
    %v481 = vunpack.c.l.b16 %v411
    %v482 = vunpack.c.h.b16 %v411
    %v483 = vunpack.c.l.b16 %v412
    %v484 = vunpack.c.l.b16 %v413
    %v485 = vunpack.c.h.b16 %v413
    %v486 = vunpack.c.l.b16 %v414
    %v487 = vunpack.c.l.b16 %v415
    %v488 = vunpack.c.h.b16 %v415
    %v489 = vunpack.c.l.b16 %v416
    %v490 = vunpack.c.l.b16 %v417
    %v491 = vunpack.c.h.b16 %v417
    %v492 = vunpack.c.l.b16 %v418
    %v493 = vunpack.c.l.b16 %v419
    %v494 = vunpack.c.h.b16 %v419
    %v495 = vunpack.c.l.b16 %v420
    %v496 = vunpack.c.l.b16 %v421
    %v497 = vunpack.c.h.b16 %v421
    %v498 = vunpack.c.l.b16 %v422
    %v499 = vunpack.c.l.b16 %v423
    %v500 = vunpack.c.h.b16 %v423
    %v501 = vunpack.c.l.b16 %v424
    %v502 = vunpack.c.l.b16 %v425
    %v503 = vunpack.c.h.b16 %v425
    %v504 = vunpack.c.l.b16 %v426
    %v505 = vunpack.c.l.b16 %v427
    %v506 = vunpack.c.h.b16 %v427
    %v507 = vunpack.c.l.b16 %v428
    %v508 = vunpack.c.l.b16 %v429
    %v509 = vunpack.c.h.b16 %v429
    %v510 = vunpack.c.l.b16 %v430
    %v511 = vunpack.c.l.b16 %v431
    %v512 = vunpack.c.h.b16 %v431
    %v513 = vunpack.c.l.b16 %v432
    %v514 = vunpack.c.l.b16 %v433
    %v515 = vunpack.c.h.b16 %v433
    %v516 = vunpack.c.l.b16 %v434
    %v517 = vunpack.c.l.b16 %v435
    %v518 = vunpack.c.h.b16 %v435
    %v519 = vunpack.c.l.b16 %v436
    %v520 = vpack.c.b16 %v475, %v472
    %v521 = vpack.c.b16 %v476, %v473
    %v522 = vpack.c.b16 %v477, %v474
    %v523 = vpack.c.b16 %v481, %v478
    %v524 = vpack.c.b16 %v482, %v479
    %v525 = vpack.c.b16 %v483, %v480
    %v526 = vpack.c.b16 %v487, %v484
    %v527 = vpack.c.b16 %v488, %v485
    %v528 = vpack.c.b16 %v489, %v486
    %v529 = vpack.c.b16 %v493, %v490
    %v530 = vpack.c.b16 %v494, %v491
    %v531 = vpack.c.b16 %v495, %v492
    %v532 = vpack.c.b16 %v499, %v496
    %v533 = vpack.c.b16 %v500, %v497
    %v534 = vpack.c.b16 %v501, %v498
    %v535 = vpack.c.b16 %v505, %v502
    %v536 = vpack.c.b16 %v506, %v503
    %v537 = vpack.c.b16 %v507, %v504
    %v538 = vpack.c.b16 %v511, %v508
    %v539 = vpack.c.b16 %v512, %v509
    %v540 = vpack.c.b16 %v513, %v510
    %v541 = vpack.c.b16 %v517, %v514
    %v542 = vpack.c.b16 %v518, %v515
    %v543 = vpack.c.b16 %v519, %v516
    %568 = vmatprep.subr.bf16.mxu0 %v521
    %569 = vmatpush1.bf16.msra.mxu0 %v520
    %570 = vmatprep.subr.bf16.mxu0 %v524
    %571 = vmatpush1.bf16.msra.mxu0 %v523
    %572 = vmatprep.subr.bf16.mxu0 %v527
    %573 = vmatpush1.bf16.msra.mxu0 %v526
    %574 = vmatprep.subr.bf16.mxu0 %v530
    %575 = vmatpush1.bf16.msra.mxu0 %v529
    %576 = vmatprep.subr.bf16.mxu0 %v533
    %577 = vmatpush1.bf16.msra.mxu0 %v532
    %578 = vmatprep.subr.bf16.mxu0 %v536
    %579 = vmatpush1.bf16.msra.mxu0 %v535
    %580 = vmatprep.subr.bf16.mxu0 %v539
    %581 = vmatpush1.bf16.msra.mxu0 %v538
    %582 = vmatprep.subr.bf16.mxu0 %v542
    %583 = vmatpush1.bf16.msra.mxu0 %v541
    %584 = vmatprep.subr.bf16.mxu0 0
    %585 = vmatpush1.bf16.msra.mxu0 0
    %586 = vmatprep.subr.bf16.mxu0 0
    %587 = vmatpush1.bf16.msra.mxu0 0
    %588 = vmatprep.subr.bf16.mxu0 0
    %589 = vmatpush1.bf16.msra.mxu0 0
    %590 = vmatprep.subr.bf16.mxu0 0
    %591 = vmatpush1.bf16.msra.mxu0 0
    %592 = vmatprep.subr.bf16.mxu0 0
    %593 = vmatpush1.bf16.msra.mxu0 0
    %594 = vmatprep.subr.bf16.mxu0 0
    %595 = vmatpush1.bf16.msra.mxu0 0
    %596 = vmatprep.subr.bf16.mxu0 0
    %597 = vmatpush1.bf16.msra.mxu0 0
    %598 = vmatprep.subr.bf16.mxu0 0
    %599 = vmatpush1.bf16.msra.mxu0 0
    %600 = vmatprep.mubr.bf16.mxu0 0
    %601 = vmatmul.mubr.bf16.gmra.mrb[0].mxu0 %v439
    %v602 = vpop.f32.mrb[0].mxu0
    %v603 = vadd.f32 0.0, %v602
    %v604 = vpop.f32.mrb[0].mxu0
    %v605 = vadd.f32 0.0, %v604
    %v606 = vpop.f32.mrb[0].mxu0
    %v607 = vpop.f32.mrb[0].mxu0
    %608 = vdwg.mxu0
    %609 = vmatprep.subr.bf16.mxu0 0
    %610 = vmatpush1.bf16.msra.mxu0 %v522
    %611 = vmatprep.subr.bf16.mxu0 0
    %612 = vmatpush1.bf16.msra.mxu0 %v525
    %613 = vmatprep.subr.bf16.mxu0 0
    %614 = vmatpush1.bf16.msra.mxu0 %v528
    %615 = vmatprep.subr.bf16.mxu0 0
    %616 = vmatpush1.bf16.msra.mxu0 %v531
    %617 = vmatprep.subr.bf16.mxu0 0
    %618 = vmatpush1.bf16.msra.mxu0 %v534
    %619 = vmatprep.subr.bf16.mxu0 0
    %620 = vmatpush1.bf16.msra.mxu0 %v537
    %621 = vmatprep.subr.bf16.mxu0 0
    %622 = vmatpush1.bf16.msra.mxu0 %v540
    %623 = vmatprep.subr.bf16.mxu0 0
    %624 = vmatpush1.bf16.msra.mxu0 %v543
    %625 = vmatprep.subr.bf16.mxu0 0
    %626 = vmatpush1.bf16.msra.mxu0 0
    %627 = vmatprep.subr.bf16.mxu0 0
    %628 = vmatpush1.bf16.msra.mxu0 0
    %629 = vmatprep.subr.bf16.mxu0 0
    %630 = vmatpush1.bf16.msra.mxu0 0
    %631 = vmatprep.subr.bf16.mxu0 0
    %632 = vmatpush1.bf16.msra.mxu0 0
    %633 = vmatprep.subr.bf16.mxu0 0
    %634 = vmatpush1.bf16.msra.mxu0 0
    %635 = vmatprep.subr.bf16.mxu0 0
    %636 = vmatpush1.bf16.msra.mxu0 0
    %637 = vmatprep.subr.bf16.mxu0 0
    %638 = vmatpush1.bf16.msra.mxu0 0
    %639 = vmatprep.subr.bf16.mxu0 0
    %640 = vmatpush1.bf16.msra.mxu0 0
    %641 = vmatprep.mubr.bf16.mxu0 0
    %642 = vmatmul.mubr.bf16.gmra.mrb[0].mxu0 %v439
    %v643 = vpop.f32.mrb[0].mxu0
    %v644 = vadd.f32 0.0, %v643
    %v645 = vpop.f32.mrb[0].mxu0
    %v646 = vpop.f32.mrb[0].mxu0
    %v647 = vpop.f32.mrb[0].mxu0
    %648 = vdwg.mxu0
    %v649 = vadd.f32 %v359, %v603
    %v650 = vxor.u32 %v649, 2147483648
    %v651 = vmul.f32 %v650, 1.442695
    %v652 = vpow.pop %v651
    %v653 = vadd.f32 %v652, 1.0
    %v654 = vrcp.pop %v653
    %v655 = vmul.f32 1.0, %v654
    %v656 = vadd.f32 %v361, %v605
    %v657 = vxor.u32 %v656, 2147483648
    %v658 = vmul.f32 %v657, 1.442695
    %v659 = vpow.pop %v658
    %v660 = vadd.f32 %v659, 1.0
    %v661 = vrcp.pop %v660
    %v662 = vmul.f32 1.0, %v661
    %v663 = vadd.f32 %v644, %v437
    %v664 = vmul.f32 %v655, %v663
    %v665 = vadd.f32 %v400, %v664
    %v666 = vtanh.pop %v665
    %v667 = vsub.f32 %v438, %v666
    %v668 = vmul.f32 %v662, %v667
    %v669 = vadd.f32 %v666, %v668
    %p670 = scmp.gt.s32.totalorder %s86, 0
    %s671 = scalar_select %p670, 1, 0
    %v672 = vstv %s671
    %vm673 = vcmp.eq.s32.totalorder %v672, 1
    %v674 = vsel %vm673, %v669, %v438
    %v675 = vpack.c.bf16 %v674, %v674
    %676 = vmatprep.subr.bf16.mxu0 %v521
    %677 = vmatpush1.bf16.msra.mxu0 %v520
    %678 = vmatprep.subr.bf16.mxu0 %v524
    %679 = vmatpush1.bf16.msra.mxu0 %v523
    %680 = vmatprep.subr.bf16.mxu0 %v527
    %681 = vmatpush1.bf16.msra.mxu0 %v526
    %682 = vmatprep.subr.bf16.mxu0 %v530
    %683 = vmatpush1.bf16.msra.mxu0 %v529
    %684 = vmatprep.subr.bf16.mxu0 %v533
    %685 = vmatpush1.bf16.msra.mxu0 %v532
    %686 = vmatprep.subr.bf16.mxu0 %v536
    %687 = vmatpush1.bf16.msra.mxu0 %v535
    %688 = vmatprep.subr.bf16.mxu0 %v539
    %689 = vmatpush1.bf16.msra.mxu0 %v538
    %690 = vmatprep.subr.bf16.mxu0 %v542
    %691 = vmatpush1.bf16.msra.mxu0 %v541
    %692 = vmatprep.subr.bf16.mxu0 0
    %693 = vmatpush1.bf16.msra.mxu0 0
    %694 = vmatprep.subr.bf16.mxu0 0
    %695 = vmatpush1.bf16.msra.mxu0 0
    %696 = vmatprep.subr.bf16.mxu0 0
    %697 = vmatpush1.bf16.msra.mxu0 0
    %698 = vmatprep.subr.bf16.mxu0 0
    %699 = vmatpush1.bf16.msra.mxu0 0
    %700 = vmatprep.subr.bf16.mxu0 0
    %701 = vmatpush1.bf16.msra.mxu0 0
    %702 = vmatprep.subr.bf16.mxu0 0
    %703 = vmatpush1.bf16.msra.mxu0 0
    %704 = vmatprep.subr.bf16.mxu0 0
    %705 = vmatpush1.bf16.msra.mxu0 0
    %706 = vmatprep.subr.bf16.mxu0 0
    %707 = vmatpush1.bf16.msra.mxu0 0
    %708 = vmatprep.mubr.bf16.mxu0 0
    %709 = vmatmul.mubr.bf16.gmra.mrb[0].mxu0 %v675
    %v710 = vpop.f32.mrb[0].mxu0
    %v711 = vadd.f32 0.0, %v710
    %v712 = vpop.f32.mrb[0].mxu0
    %v713 = vadd.f32 0.0, %v712
    %v714 = vpop.f32.mrb[0].mxu0
    %v715 = vpop.f32.mrb[0].mxu0
    %716 = vdwg.mxu0
    %717 = vmatprep.subr.bf16.mxu0 0
    %718 = vmatpush1.bf16.msra.mxu0 %v522
    %719 = vmatprep.subr.bf16.mxu0 0
    %720 = vmatpush1.bf16.msra.mxu0 %v525
    %721 = vmatprep.subr.bf16.mxu0 0
    %722 = vmatpush1.bf16.msra.mxu0 %v528
    %723 = vmatprep.subr.bf16.mxu0 0
    %724 = vmatpush1.bf16.msra.mxu0 %v531
    %725 = vmatprep.subr.bf16.mxu0 0
    %726 = vmatpush1.bf16.msra.mxu0 %v534
    %727 = vmatprep.subr.bf16.mxu0 0
    %728 = vmatpush1.bf16.msra.mxu0 %v537
    %729 = vmatprep.subr.bf16.mxu0 0
    %730 = vmatpush1.bf16.msra.mxu0 %v540
    %731 = vmatprep.subr.bf16.mxu0 0
    %732 = vmatpush1.bf16.msra.mxu0 %v543
    %733 = vmatprep.subr.bf16.mxu0 0
    %734 = vmatpush1.bf16.msra.mxu0 0
    %735 = vmatprep.subr.bf16.mxu0 0
    %736 = vmatpush1.bf16.msra.mxu0 0
    %737 = vmatprep.subr.bf16.mxu0 0
    %738 = vmatpush1.bf16.msra.mxu0 0
    %739 = vmatprep.subr.bf16.mxu0 0
    %740 = vmatpush1.bf16.msra.mxu0 0
    %741 = vmatprep.subr.bf16.mxu0 0
    %742 = vmatpush1.bf16.msra.mxu0 0
    %743 = vmatprep.subr.bf16.mxu0 0
    %744 = vmatpush1.bf16.msra.mxu0 0
    %745 = vmatprep.subr.bf16.mxu0 0
    %746 = vmatpush1.bf16.msra.mxu0 0
    %747 = vmatprep.subr.bf16.mxu0 0
    %748 = vmatpush1.bf16.msra.mxu0 0
    %749 = vmatprep.mubr.bf16.mxu0 0
    %750 = vmatmul.mubr.bf16.gmra.mrb[0].mxu0 %v675
    %v751 = vpop.f32.mrb[0].mxu0
    %v752 = vadd.f32 0.0, %v751
    %v753 = vpop.f32.mrb[0].mxu0
    %v754 = vpop.f32.mrb[0].mxu0
    %v755 = vpop.f32.mrb[0].mxu0
    %756 = vdwg.mxu0
    %v758 = vrot.slane %v711, 7
    %v760 = vadd.f32 %v359, %v758
    %v761 = vxor.u32 %v760, 2147483648
    %v762 = vmul.f32 %v761, 1.442695
    %v763 = vpow.pop %v762
    %v764 = vadd.f32 %v763, 1.0
    %v765 = vrcp.pop %v764
    %v766 = vmul.f32 1.0, %v765
    %v768 = vrot.slane %v713, 7
    %v770 = vadd.f32 %v361, %v768
    %v771 = vxor.u32 %v770, 2147483648
    %v772 = vmul.f32 %v771, 1.442695
    %v773 = vpow.pop %v772
    %v774 = vadd.f32 %v773, 1.0
    %v775 = vrcp.pop %v774
    %v776 = vmul.f32 1.0, %v775
    %v777 = vadd.f32 %v752, %v437
    %v779 = vrot.slane %v777, 7
    %v781 = vmul.f32 %v766, %v779
    %v782 = vadd.f32 %v400, %v781
    %v783 = vtanh.pop %v782
    %v785 = vrot.slane %v783, 1
    %v787 = vsub.f32 %v674, %v785
    %v789 = vrot.slane %v787, 7
    %v791 = vmul.f32 %v776, %v789
    %v792 = vadd.f32 %v783, %v791
    %p793 = scmp.gt.s32.totalorder %s86, 1
    %s794 = scalar_select %p793, 1, 0
    %v795 = vstv %s794
    %vm796 = vcmp.eq.s32.totalorder %v795, 1
    %v798 = vrot.slane %v674, 7
    %v800 = vsel %vm796, %v792, %v798
    %v801 = vpack.c.bf16 %v800, %v800
    %v803 = vshrl.u32 %v801, 16
    %806 = vmatprep.subr.bf16.mxu0 %v521
    %807 = vmatpush1.bf16.msra.mxu0 %v520
    %808 = vmatprep.subr.bf16.mxu0 %v524
    %809 = vmatpush1.bf16.msra.mxu0 %v523
    %810 = vmatprep.subr.bf16.mxu0 %v527
    %811 = vmatpush1.bf16.msra.mxu0 %v526
    %812 = vmatprep.subr.bf16.mxu0 %v530
    %813 = vmatpush1.bf16.msra.mxu0 %v529
    %814 = vmatprep.subr.bf16.mxu0 %v533
    %815 = vmatpush1.bf16.msra.mxu0 %v532
    %816 = vmatprep.subr.bf16.mxu0 %v536
    %817 = vmatpush1.bf16.msra.mxu0 %v535
    %818 = vmatprep.subr.bf16.mxu0 %v539
    %819 = vmatpush1.bf16.msra.mxu0 %v538
    %820 = vmatprep.subr.bf16.mxu0 %v542
    %821 = vmatpush1.bf16.msra.mxu0 %v541
    %822 = vmatprep.subr.bf16.mxu0 0
    %823 = vmatpush1.bf16.msra.mxu0 0
    %824 = vmatprep.subr.bf16.mxu0 0
    %825 = vmatpush1.bf16.msra.mxu0 0
    %826 = vmatprep.subr.bf16.mxu0 0
    %827 = vmatpush1.bf16.msra.mxu0 0
    %828 = vmatprep.subr.bf16.mxu0 0
    %829 = vmatpush1.bf16.msra.mxu0 0
    %830 = vmatprep.subr.bf16.mxu0 0
    %831 = vmatpush1.bf16.msra.mxu0 0
    %832 = vmatprep.subr.bf16.mxu0 0
    %833 = vmatpush1.bf16.msra.mxu0 0
    %834 = vmatprep.subr.bf16.mxu0 0
    %835 = vmatpush1.bf16.msra.mxu0 0
    %836 = vmatprep.subr.bf16.mxu0 0
    %837 = vmatpush1.bf16.msra.mxu0 0
    %838 = vmatprep.mubr.bf16.mxu0 0
    %839 = vmatmul.mubr.bf16.gmra.mrb[0].mxu0 %v803
    %v840 = vpop.f32.mrb[0].mxu0
    %v841 = vadd.f32 0.0, %v840
    %v842 = vpop.f32.mrb[0].mxu0
    %v843 = vadd.f32 0.0, %v842
    %v844 = vpop.f32.mrb[0].mxu0
    %v845 = vpop.f32.mrb[0].mxu0
    %846 = vdwg.mxu0
    %847 = vmatprep.subr.bf16.mxu0 0
    %848 = vmatpush1.bf16.msra.mxu0 %v522
    %849 = vmatprep.subr.bf16.mxu0 0
    %850 = vmatpush1.bf16.msra.mxu0 %v525
    %851 = vmatprep.subr.bf16.mxu0 0
    %852 = vmatpush1.bf16.msra.mxu0 %v528
    %853 = vmatprep.subr.bf16.mxu0 0
    %854 = vmatpush1.bf16.msra.mxu0 %v531
    %855 = vmatprep.subr.bf16.mxu0 0
    %856 = vmatpush1.bf16.msra.mxu0 %v534
    %857 = vmatprep.subr.bf16.mxu0 0
    %858 = vmatpush1.bf16.msra.mxu0 %v537
    %859 = vmatprep.subr.bf16.mxu0 0
    %860 = vmatpush1.bf16.msra.mxu0 %v540
    %861 = vmatprep.subr.bf16.mxu0 0
    %862 = vmatpush1.bf16.msra.mxu0 %v543
    %863 = vmatprep.subr.bf16.mxu0 0
    %864 = vmatpush1.bf16.msra.mxu0 0
    %865 = vmatprep.subr.bf16.mxu0 0
    %866 = vmatpush1.bf16.msra.mxu0 0
    %867 = vmatprep.subr.bf16.mxu0 0
    %868 = vmatpush1.bf16.msra.mxu0 0
    %869 = vmatprep.subr.bf16.mxu0 0
    %870 = vmatpush1.bf16.msra.mxu0 0
    %871 = vmatprep.subr.bf16.mxu0 0
    %872 = vmatpush1.bf16.msra.mxu0 0
    %873 = vmatprep.subr.bf16.mxu0 0
    %874 = vmatpush1.bf16.msra.mxu0 0
    %875 = vmatprep.subr.bf16.mxu0 0
    %876 = vmatpush1.bf16.msra.mxu0 0
    %877 = vmatprep.subr.bf16.mxu0 0
    %878 = vmatpush1.bf16.msra.mxu0 0
    %879 = vmatprep.mubr.bf16.mxu0 0
    %880 = vmatmul.mubr.bf16.gmra.mrb[0].mxu0 %v803
    %v881 = vpop.f32.mrb[0].mxu0
    %v882 = vadd.f32 0.0, %v881
    %v883 = vpop.f32.mrb[0].mxu0
    %v884 = vpop.f32.mrb[0].mxu0
    %v885 = vpop.f32.mrb[0].mxu0
    %886 = vdwg.mxu0
    %v888 = vrot.slane %v841, 6
    %v890 = vadd.f32 %v359, %v888
    %v891 = vxor.u32 %v890, 2147483648
    %v892 = vmul.f32 %v891, 1.442695
    %v893 = vpow.pop %v892
    %v894 = vadd.f32 %v893, 1.0
    %v895 = vrcp.pop %v894
    %v896 = vmul.f32 1.0, %v895
    %v898 = vrot.slane %v843, 6
    %v900 = vadd.f32 %v361, %v898
    %v901 = vxor.u32 %v900, 2147483648
    %v902 = vmul.f32 %v901, 1.442695
    %v903 = vpow.pop %v902
    %v904 = vadd.f32 %v903, 1.0
    %v905 = vrcp.pop %v904
    %v906 = vmul.f32 1.0, %v905
    %v907 = vadd.f32 %v882, %v437
    %v909 = vrot.slane %v907, 6
    %v911 = vmul.f32 %v896, %v909
    %v912 = vadd.f32 %v400, %v911
    %v913 = vtanh.pop %v912
    %v915 = vrot.slane %v913, 1
    %v917 = vsub.f32 %v800, %v915
    %v919 = vrot.slane %v917, 7
    %v921 = vmul.f32 %v906, %v919
    %v922 = vadd.f32 %v913, %v921
    %p923 = scmp.gt.s32.totalorder %s86, 2
    %s924 = scalar_select %p923, 1, 0
    %v925 = vstv %s924
    %vm926 = vcmp.eq.s32.totalorder %v925, 1
    %v928 = vrot.slane %v800, 7
    %v930 = vsel %vm926, %v922, %v928
    %v931 = vpack.c.bf16 %v930, %v930
    %v933 = vrot.slane %v931, 1
    %935 = vmatprep.subr.bf16.mxu0 %v521
    %936 = vmatpush1.bf16.msra.mxu0 %v520
    %937 = vmatprep.subr.bf16.mxu0 %v524
    %938 = vmatpush1.bf16.msra.mxu0 %v523
    %939 = vmatprep.subr.bf16.mxu0 %v527
    %940 = vmatpush1.bf16.msra.mxu0 %v526
    %941 = vmatprep.subr.bf16.mxu0 %v530
    %942 = vmatpush1.bf16.msra.mxu0 %v529
    %943 = vmatprep.subr.bf16.mxu0 %v533
    %944 = vmatpush1.bf16.msra.mxu0 %v532
    %945 = vmatprep.subr.bf16.mxu0 %v536
    %946 = vmatpush1.bf16.msra.mxu0 %v535
    %947 = vmatprep.subr.bf16.mxu0 %v539
    %948 = vmatpush1.bf16.msra.mxu0 %v538
    %949 = vmatprep.subr.bf16.mxu0 %v542
    %950 = vmatpush1.bf16.msra.mxu0 %v541
    %951 = vmatprep.subr.bf16.mxu0 0
    %952 = vmatpush1.bf16.msra.mxu0 0
    %953 = vmatprep.subr.bf16.mxu0 0
    %954 = vmatpush1.bf16.msra.mxu0 0
    %955 = vmatprep.subr.bf16.mxu0 0
    %956 = vmatpush1.bf16.msra.mxu0 0
    %957 = vmatprep.subr.bf16.mxu0 0
    %958 = vmatpush1.bf16.msra.mxu0 0
    %959 = vmatprep.subr.bf16.mxu0 0
    %960 = vmatpush1.bf16.msra.mxu0 0
    %961 = vmatprep.subr.bf16.mxu0 0
    %962 = vmatpush1.bf16.msra.mxu0 0
    %963 = vmatprep.subr.bf16.mxu0 0
    %964 = vmatpush1.bf16.msra.mxu0 0
    %965 = vmatprep.subr.bf16.mxu0 0
    %966 = vmatpush1.bf16.msra.mxu0 0
    %967 = vmatprep.mubr.bf16.mxu0 0
    %968 = vmatmul.mubr.bf16.gmra.mrb[0].mxu0 %v933
    %v969 = vpop.f32.mrb[0].mxu0
    %v970 = vadd.f32 0.0, %v969
    %v971 = vpop.f32.mrb[0].mxu0
    %v972 = vadd.f32 0.0, %v971
    %v973 = vpop.f32.mrb[0].mxu0
    %v974 = vpop.f32.mrb[0].mxu0
    %975 = vdwg.mxu0
    %976 = vmatprep.subr.bf16.mxu0 0
    %977 = vmatpush1.bf16.msra.mxu0 %v522
    %978 = vmatprep.subr.bf16.mxu0 0
    %979 = vmatpush1.bf16.msra.mxu0 %v525
    %980 = vmatprep.subr.bf16.mxu0 0
    %981 = vmatpush1.bf16.msra.mxu0 %v528
    %982 = vmatprep.subr.bf16.mxu0 0
    %983 = vmatpush1.bf16.msra.mxu0 %v531
    %984 = vmatprep.subr.bf16.mxu0 0
    %985 = vmatpush1.bf16.msra.mxu0 %v534
    %986 = vmatprep.subr.bf16.mxu0 0
    %987 = vmatpush1.bf16.msra.mxu0 %v537
    %988 = vmatprep.subr.bf16.mxu0 0
    %989 = vmatpush1.bf16.msra.mxu0 %v540
    %990 = vmatprep.subr.bf16.mxu0 0
    %991 = vmatpush1.bf16.msra.mxu0 %v543
    %992 = vmatprep.subr.bf16.mxu0 0
    %993 = vmatpush1.bf16.msra.mxu0 0
    %994 = vmatprep.subr.bf16.mxu0 0
    %995 = vmatpush1.bf16.msra.mxu0 0
    %996 = vmatprep.subr.bf16.mxu0 0
    %997 = vmatpush1.bf16.msra.mxu0 0
    %998 = vmatprep.subr.bf16.mxu0 0
    %999 = vmatpush1.bf16.msra.mxu0 0
    %1000 = vmatprep.subr.bf16.mxu0 0
    %1001 = vmatpush1.bf16.msra.mxu0 0
    %1002 = vmatprep.subr.bf16.mxu0 0
    %1003 = vmatpush1.bf16.msra.mxu0 0
    %1004 = vmatprep.subr.bf16.mxu0 0
    %1005 = vmatpush1.bf16.msra.mxu0 0
    %1006 = vmatprep.subr.bf16.mxu0 0
    %1007 = vmatpush1.bf16.msra.mxu0 0
    %1008 = vmatprep.mubr.bf16.mxu0 0
    %1009 = vmatmul.mubr.bf16.gmra.mrb[0].mxu0 %v933
    %v1010 = vpop.f32.mrb[0].mxu0
    %v1011 = vadd.f32 0.0, %v1010
    %v1012 = vpop.f32.mrb[0].mxu0
    %v1013 = vpop.f32.mrb[0].mxu0
    %v1014 = vpop.f32.mrb[0].mxu0
    %1015 = vdwg.mxu0
    %v1017 = vrot.slane %v970, 5
    %v1019 = vadd.f32 %v359, %v1017
    %v1020 = vxor.u32 %v1019, 2147483648
    %v1021 = vmul.f32 %v1020, 1.442695
    %v1022 = vpow.pop %v1021
    %v1023 = vadd.f32 %v1022, 1.0
    %v1024 = vrcp.pop %v1023
    %v1025 = vmul.f32 1.0, %v1024
    %v1027 = vrot.slane %v972, 5
    %v1029 = vadd.f32 %v361, %v1027
    %v1030 = vxor.u32 %v1029, 2147483648
    %v1031 = vmul.f32 %v1030, 1.442695
    %v1032 = vpow.pop %v1031
    %v1033 = vadd.f32 %v1032, 1.0
    %v1034 = vrcp.pop %v1033
    %v1035 = vmul.f32 1.0, %v1034
    %v1036 = vadd.f32 %v1011, %v437
    %v1038 = vrot.slane %v1036, 5
    %v1040 = vmul.f32 %v1025, %v1038
    %v1041 = vadd.f32 %v400, %v1040
    %v1042 = vtanh.pop %v1041
    %v1044 = vrot.slane %v1042, 1
    %v1046 = vsub.f32 %v930, %v1044
    %v1048 = vrot.slane %v1046, 7
    %v1050 = vmul.f32 %v1035, %v1048
    %v1051 = vadd.f32 %v1042, %v1050
    %p1052 = scmp.gt.s32.totalorder %s86, 3
    %s1053 = scalar_select %p1052, 1, 0
    %v1054 = vstv %s1053
    %vm1055 = vcmp.eq.s32.totalorder %v1054, 1
    %v1057 = vrot.slane %v930, 7
    %v1059 = vsel %vm1055, %v1051, %v1057
    %v1060 = vpack.c.bf16 %v1059, %v1059
    %v1062 = vshrl.u32 %v1060, 16
    %v1064 = vrot.slane %v1062, 1
    %1066 = vmatprep.subr.bf16.mxu0 %v521
    %1067 = vmatpush1.bf16.msra.mxu0 %v520
    %1068 = vmatprep.subr.bf16.mxu0 %v524
    %1069 = vmatpush1.bf16.msra.mxu0 %v523
    %1070 = vmatprep.subr.bf16.mxu0 %v527
    %1071 = vmatpush1.bf16.msra.mxu0 %v526
    %1072 = vmatprep.subr.bf16.mxu0 %v530
    %1073 = vmatpush1.bf16.msra.mxu0 %v529
    %1074 = vmatprep.subr.bf16.mxu0 %v533
    %1075 = vmatpush1.bf16.msra.mxu0 %v532
    %1076 = vmatprep.subr.bf16.mxu0 %v536
    %1077 = vmatpush1.bf16.msra.mxu0 %v535
    %1078 = vmatprep.subr.bf16.mxu0 %v539
    %1079 = vmatpush1.bf16.msra.mxu0 %v538
    %1080 = vmatprep.subr.bf16.mxu0 %v542
    %1081 = vmatpush1.bf16.msra.mxu0 %v541
    %1082 = vmatprep.subr.bf16.mxu0 0
    %1083 = vmatpush1.bf16.msra.mxu0 0
    %1084 = vmatprep.subr.bf16.mxu0 0
    %1085 = vmatpush1.bf16.msra.mxu0 0
    %1086 = vmatprep.subr.bf16.mxu0 0
    %1087 = vmatpush1.bf16.msra.mxu0 0
    %1088 = vmatprep.subr.bf16.mxu0 0
    %1089 = vmatpush1.bf16.msra.mxu0 0
    %1090 = vmatprep.subr.bf16.mxu0 0
    %1091 = vmatpush1.bf16.msra.mxu0 0
    %1092 = vmatprep.subr.bf16.mxu0 0
    %1093 = vmatpush1.bf16.msra.mxu0 0
    %1094 = vmatprep.subr.bf16.mxu0 0
    %1095 = vmatpush1.bf16.msra.mxu0 0
    %1096 = vmatprep.subr.bf16.mxu0 0
    %1097 = vmatpush1.bf16.msra.mxu0 0
    %1098 = vmatprep.mubr.bf16.mxu0 0
    %1099 = vmatmul.mubr.bf16.gmra.mrb[0].mxu0 %v1064
    %v1100 = vpop.f32.mrb[0].mxu0
    %v1101 = vadd.f32 0.0, %v1100
    %v1102 = vpop.f32.mrb[0].mxu0
    %v1103 = vadd.f32 0.0, %v1102
    %v1104 = vpop.f32.mrb[0].mxu0
    %v1105 = vpop.f32.mrb[0].mxu0
    %1106 = vdwg.mxu0
    %1107 = vmatprep.subr.bf16.mxu0 0
    %1108 = vmatpush1.bf16.msra.mxu0 %v522
    %1109 = vmatprep.subr.bf16.mxu0 0
    %1110 = vmatpush1.bf16.msra.mxu0 %v525
    %1111 = vmatprep.subr.bf16.mxu0 0
    %1112 = vmatpush1.bf16.msra.mxu0 %v528
    %1113 = vmatprep.subr.bf16.mxu0 0
    %1114 = vmatpush1.bf16.msra.mxu0 %v531
    %1115 = vmatprep.subr.bf16.mxu0 0
    %1116 = vmatpush1.bf16.msra.mxu0 %v534
    %1117 = vmatprep.subr.bf16.mxu0 0
    %1118 = vmatpush1.bf16.msra.mxu0 %v537
    %1119 = vmatprep.subr.bf16.mxu0 0
    %1120 = vmatpush1.bf16.msra.mxu0 %v540
    %1121 = vmatprep.subr.bf16.mxu0 0
    %1122 = vmatpush1.bf16.msra.mxu0 %v543
    %1123 = vmatprep.subr.bf16.mxu0 0
    %1124 = vmatpush1.bf16.msra.mxu0 0
    %1125 = vmatprep.subr.bf16.mxu0 0
    %1126 = vmatpush1.bf16.msra.mxu0 0
    %1127 = vmatprep.subr.bf16.mxu0 0
    %1128 = vmatpush1.bf16.msra.mxu0 0
    %1129 = vmatprep.subr.bf16.mxu0 0
    %1130 = vmatpush1.bf16.msra.mxu0 0
    %1131 = vmatprep.subr.bf16.mxu0 0
    %1132 = vmatpush1.bf16.msra.mxu0 0
    %1133 = vmatprep.subr.bf16.mxu0 0
    %1134 = vmatpush1.bf16.msra.mxu0 0
    %1135 = vmatprep.subr.bf16.mxu0 0
    %1136 = vmatpush1.bf16.msra.mxu0 0
    %1137 = vmatprep.subr.bf16.mxu0 0
    %1138 = vmatpush1.bf16.msra.mxu0 0
    %1139 = vmatprep.mubr.bf16.mxu0 0
    %1140 = vmatmul.mubr.bf16.gmra.mrb[0].mxu0 %v1064
    %v1141 = vpop.f32.mrb[0].mxu0
    %v1142 = vadd.f32 0.0, %v1141
    %v1143 = vpop.f32.mrb[0].mxu0
    %v1144 = vpop.f32.mrb[0].mxu0
    %v1145 = vpop.f32.mrb[0].mxu0
    %1146 = vdwg.mxu0
    %v1148 = vrot.slane %v1101, 4
    %v1150 = vadd.f32 %v359, %v1148
    %v1151 = vxor.u32 %v1150, 2147483648
    %v1152 = vmul.f32 %v1151, 1.442695
    %v1153 = vpow.pop %v1152
    %v1154 = vadd.f32 %v1153, 1.0
    %v1155 = vrcp.pop %v1154
    %v1156 = vmul.f32 1.0, %v1155
    %v1158 = vrot.slane %v1103, 4
    %v1160 = vadd.f32 %v361, %v1158
    %v1161 = vxor.u32 %v1160, 2147483648
    %v1162 = vmul.f32 %v1161, 1.442695
    %v1163 = vpow.pop %v1162
    %v1164 = vadd.f32 %v1163, 1.0
    %v1165 = vrcp.pop %v1164
    %v1166 = vmul.f32 1.0, %v1165
    %v1167 = vadd.f32 %v1142, %v437
    %v1169 = vrot.slane %v1167, 4
    %v1171 = vmul.f32 %v1156, %v1169
    %v1172 = vadd.f32 %v400, %v1171
    %v1173 = vtanh.pop %v1172
    %v1175 = vrot.slane %v1173, 1
    %v1177 = vsub.f32 %v1059, %v1175
    %v1179 = vrot.slane %v1177, 7
    %v1181 = vmul.f32 %v1166, %v1179
    %v1182 = vadd.f32 %v1173, %v1181
    %p1183 = scmp.gt.s32.totalorder %s86, 4
    %s1184 = scalar_select %p1183, 1, 0
    %v1185 = vstv %s1184
    %vm1186 = vcmp.eq.s32.totalorder %v1185, 1
    %v1188 = vrot.slane %v1059, 7
    %v1190 = vsel %vm1186, %v1182, %v1188
    %v1191 = vpack.c.bf16 %v1190, %v1190
    %v1193 = vrot.slane %v1191, 2
    %1195 = vmatprep.subr.bf16.mxu0 %v521
    %1196 = vmatpush1.bf16.msra.mxu0 %v520
    %1197 = vmatprep.subr.bf16.mxu0 %v524
    %1198 = vmatpush1.bf16.msra.mxu0 %v523
    %1199 = vmatprep.subr.bf16.mxu0 %v527
    %1200 = vmatpush1.bf16.msra.mxu0 %v526
    %1201 = vmatprep.subr.bf16.mxu0 %v530
    %1202 = vmatpush1.bf16.msra.mxu0 %v529
    %1203 = vmatprep.subr.bf16.mxu0 %v533
    %1204 = vmatpush1.bf16.msra.mxu0 %v532
    %1205 = vmatprep.subr.bf16.mxu0 %v536
    %1206 = vmatpush1.bf16.msra.mxu0 %v535
    %1207 = vmatprep.subr.bf16.mxu0 %v539
    %1208 = vmatpush1.bf16.msra.mxu0 %v538
    %1209 = vmatprep.subr.bf16.mxu0 %v542
    %1210 = vmatpush1.bf16.msra.mxu0 %v541
    %1211 = vmatprep.subr.bf16.mxu0 0
    %1212 = vmatpush1.bf16.msra.mxu0 0
    %1213 = vmatprep.subr.bf16.mxu0 0
    %1214 = vmatpush1.bf16.msra.mxu0 0
    %1215 = vmatprep.subr.bf16.mxu0 0
    %1216 = vmatpush1.bf16.msra.mxu0 0
    %1217 = vmatprep.subr.bf16.mxu0 0
    %1218 = vmatpush1.bf16.msra.mxu0 0
    %1219 = vmatprep.subr.bf16.mxu0 0
    %1220 = vmatpush1.bf16.msra.mxu0 0
    %1221 = vmatprep.subr.bf16.mxu0 0
    %1222 = vmatpush1.bf16.msra.mxu0 0
    %1223 = vmatprep.subr.bf16.mxu0 0
    %1224 = vmatpush1.bf16.msra.mxu0 0
    %1225 = vmatprep.subr.bf16.mxu0 0
    %1226 = vmatpush1.bf16.msra.mxu0 0
    %1227 = vmatprep.mubr.bf16.mxu0 0
    %1228 = vmatmul.mubr.bf16.gmra.mrb[0].mxu0 %v1193
    %v1229 = vpop.f32.mrb[0].mxu0
    %v1230 = vadd.f32 0.0, %v1229
    %v1231 = vpop.f32.mrb[0].mxu0
    %v1232 = vadd.f32 0.0, %v1231
    %v1233 = vpop.f32.mrb[0].mxu0
    %v1234 = vpop.f32.mrb[0].mxu0
    %1235 = vdwg.mxu0
    %1236 = vmatprep.subr.bf16.mxu0 0
    %1237 = vmatpush1.bf16.msra.mxu0 %v522
    %1238 = vmatprep.subr.bf16.mxu0 0
    %1239 = vmatpush1.bf16.msra.mxu0 %v525
    %1240 = vmatprep.subr.bf16.mxu0 0
    %1241 = vmatpush1.bf16.msra.mxu0 %v528
    %1242 = vmatprep.subr.bf16.mxu0 0
    %1243 = vmatpush1.bf16.msra.mxu0 %v531
    %1244 = vmatprep.subr.bf16.mxu0 0
    %1245 = vmatpush1.bf16.msra.mxu0 %v534
    %1246 = vmatprep.subr.bf16.mxu0 0
    %1247 = vmatpush1.bf16.msra.mxu0 %v537
    %1248 = vmatprep.subr.bf16.mxu0 0
    %1249 = vmatpush1.bf16.msra.mxu0 %v540
    %1250 = vmatprep.subr.bf16.mxu0 0
    %1251 = vmatpush1.bf16.msra.mxu0 %v543
    %1252 = vmatprep.subr.bf16.mxu0 0
    %1253 = vmatpush1.bf16.msra.mxu0 0
    %1254 = vmatprep.subr.bf16.mxu0 0
    %1255 = vmatpush1.bf16.msra.mxu0 0
    %1256 = vmatprep.subr.bf16.mxu0 0
    %1257 = vmatpush1.bf16.msra.mxu0 0
    %1258 = vmatprep.subr.bf16.mxu0 0
    %1259 = vmatpush1.bf16.msra.mxu0 0
    %1260 = vmatprep.subr.bf16.mxu0 0
    %1261 = vmatpush1.bf16.msra.mxu0 0
    %1262 = vmatprep.subr.bf16.mxu0 0
    %1263 = vmatpush1.bf16.msra.mxu0 0
    %1264 = vmatprep.subr.bf16.mxu0 0
    %1265 = vmatpush1.bf16.msra.mxu0 0
    %1266 = vmatprep.subr.bf16.mxu0 0
    %1267 = vmatpush1.bf16.msra.mxu0 0
    %1268 = vmatprep.mubr.bf16.mxu0 0
    %1269 = vmatmul.mubr.bf16.gmra.mrb[0].mxu0 %v1193
    %v1270 = vpop.f32.mrb[0].mxu0
    %v1271 = vadd.f32 0.0, %v1270
    %v1272 = vpop.f32.mrb[0].mxu0
    %v1273 = vpop.f32.mrb[0].mxu0
    %v1274 = vpop.f32.mrb[0].mxu0
    %1275 = vdwg.mxu0
    %v1277 = vrot.slane %v1230, 3
    %v1279 = vadd.f32 %v359, %v1277
    %v1280 = vxor.u32 %v1279, 2147483648
    %v1281 = vmul.f32 %v1280, 1.442695
    %v1282 = vpow.pop %v1281
    %v1283 = vadd.f32 %v1282, 1.0
    %v1284 = vrcp.pop %v1283
    %v1285 = vmul.f32 1.0, %v1284
    %v1287 = vrot.slane %v1232, 3
    %v1289 = vadd.f32 %v361, %v1287
    %v1290 = vxor.u32 %v1289, 2147483648
    %v1291 = vmul.f32 %v1290, 1.442695
    %v1292 = vpow.pop %v1291
    %v1293 = vadd.f32 %v1292, 1.0
    %v1294 = vrcp.pop %v1293
    %v1295 = vmul.f32 1.0, %v1294
    %v1296 = vadd.f32 %v1271, %v437
    %v1298 = vrot.slane %v1296, 3
    %v1300 = vmul.f32 %v1285, %v1298
    %v1301 = vadd.f32 %v400, %v1300
    %v1302 = vtanh.pop %v1301
    %v1304 = vrot.slane %v1302, 1
    %v1306 = vsub.f32 %v1190, %v1304
    %v1308 = vrot.slane %v1306, 7
    %v1310 = vmul.f32 %v1295, %v1308
    %v1311 = vadd.f32 %v1302, %v1310
    %p1312 = scmp.gt.s32.totalorder %s86, 5
    %s1313 = scalar_select %p1312, 1, 0
    %v1314 = vstv %s1313
    %vm1315 = vcmp.eq.s32.totalorder %v1314, 1
    %v1317 = vrot.slane %v1190, 7
    %v1319 = vsel %vm1315, %v1311, %v1317
    %v1320 = vpack.c.bf16 %v1319, %v1319
    %v1322 = vshrl.u32 %v1320, 16
    %v1324 = vrot.slane %v1322, 2
    %1326 = vmatprep.subr.bf16.mxu0 %v521
    %1327 = vmatpush1.bf16.msra.mxu0 %v520
    %1328 = vmatprep.subr.bf16.mxu0 %v524
    %1329 = vmatpush1.bf16.msra.mxu0 %v523
    %1330 = vmatprep.subr.bf16.mxu0 %v527
    %1331 = vmatpush1.bf16.msra.mxu0 %v526
    %1332 = vmatprep.subr.bf16.mxu0 %v530
    %1333 = vmatpush1.bf16.msra.mxu0 %v529
    %1334 = vmatprep.subr.bf16.mxu0 %v533
    %1335 = vmatpush1.bf16.msra.mxu0 %v532
    %1336 = vmatprep.subr.bf16.mxu0 %v536
    %1337 = vmatpush1.bf16.msra.mxu0 %v535
    %1338 = vmatprep.subr.bf16.mxu0 %v539
    %1339 = vmatpush1.bf16.msra.mxu0 %v538
    %1340 = vmatprep.subr.bf16.mxu0 %v542
    %1341 = vmatpush1.bf16.msra.mxu0 %v541
    %1342 = vmatprep.subr.bf16.mxu0 0
    %1343 = vmatpush1.bf16.msra.mxu0 0
    %1344 = vmatprep.subr.bf16.mxu0 0
    %1345 = vmatpush1.bf16.msra.mxu0 0
    %1346 = vmatprep.subr.bf16.mxu0 0
    %1347 = vmatpush1.bf16.msra.mxu0 0
    %1348 = vmatprep.subr.bf16.mxu0 0
    %1349 = vmatpush1.bf16.msra.mxu0 0
    %1350 = vmatprep.subr.bf16.mxu0 0
    %1351 = vmatpush1.bf16.msra.mxu0 0
    %1352 = vmatprep.subr.bf16.mxu0 0
    %1353 = vmatpush1.bf16.msra.mxu0 0
    %1354 = vmatprep.subr.bf16.mxu0 0
    %1355 = vmatpush1.bf16.msra.mxu0 0
    %1356 = vmatprep.subr.bf16.mxu0 0
    %1357 = vmatpush1.bf16.msra.mxu0 0
    %1358 = vmatprep.mubr.bf16.mxu0 0
    %1359 = vmatmul.mubr.bf16.gmra.mrb[0].mxu0 %v1324
    %v1360 = vpop.f32.mrb[0].mxu0
    %v1361 = vadd.f32 0.0, %v1360
    %v1362 = vpop.f32.mrb[0].mxu0
    %v1363 = vadd.f32 0.0, %v1362
    %v1364 = vpop.f32.mrb[0].mxu0
    %v1365 = vpop.f32.mrb[0].mxu0
    %1366 = vdwg.mxu0
    %1367 = vmatprep.subr.bf16.mxu0 0
    %1368 = vmatpush1.bf16.msra.mxu0 %v522
    %1369 = vmatprep.subr.bf16.mxu0 0
    %1370 = vmatpush1.bf16.msra.mxu0 %v525
    %1371 = vmatprep.subr.bf16.mxu0 0
    %1372 = vmatpush1.bf16.msra.mxu0 %v528
    %1373 = vmatprep.subr.bf16.mxu0 0
    %1374 = vmatpush1.bf16.msra.mxu0 %v531
    %1375 = vmatprep.subr.bf16.mxu0 0
    %1376 = vmatpush1.bf16.msra.mxu0 %v534
    %1377 = vmatprep.subr.bf16.mxu0 0
    %1378 = vmatpush1.bf16.msra.mxu0 %v537
    %1379 = vmatprep.subr.bf16.mxu0 0
    %1380 = vmatpush1.bf16.msra.mxu0 %v540
    %1381 = vmatprep.subr.bf16.mxu0 0
    %1382 = vmatpush1.bf16.msra.mxu0 %v543
    %1383 = vmatprep.subr.bf16.mxu0 0
    %1384 = vmatpush1.bf16.msra.mxu0 0
    %1385 = vmatprep.subr.bf16.mxu0 0
    %1386 = vmatpush1.bf16.msra.mxu0 0
    %1387 = vmatprep.subr.bf16.mxu0 0
    %1388 = vmatpush1.bf16.msra.mxu0 0
    %1389 = vmatprep.subr.bf16.mxu0 0
    %1390 = vmatpush1.bf16.msra.mxu0 0
    %1391 = vmatprep.subr.bf16.mxu0 0
    %1392 = vmatpush1.bf16.msra.mxu0 0
    %1393 = vmatprep.subr.bf16.mxu0 0
    %1394 = vmatpush1.bf16.msra.mxu0 0
    %1395 = vmatprep.subr.bf16.mxu0 0
    %1396 = vmatpush1.bf16.msra.mxu0 0
    %1397 = vmatprep.subr.bf16.mxu0 0
    %1398 = vmatpush1.bf16.msra.mxu0 0
    %1399 = vmatprep.mubr.bf16.mxu0 0
    %1400 = vmatmul.mubr.bf16.gmra.mrb[0].mxu0 %v1324
    %v1401 = vpop.f32.mrb[0].mxu0
    %v1402 = vadd.f32 0.0, %v1401
    %v1403 = vpop.f32.mrb[0].mxu0
    %v1404 = vpop.f32.mrb[0].mxu0
    %v1405 = vpop.f32.mrb[0].mxu0
    %1406 = vdwg.mxu0
    %v1408 = vrot.slane %v1361, 2
    %v1410 = vadd.f32 %v359, %v1408
    %v1411 = vxor.u32 %v1410, 2147483648
    %v1412 = vmul.f32 %v1411, 1.442695
    %v1413 = vpow.pop %v1412
    %v1414 = vadd.f32 %v1413, 1.0
    %v1415 = vrcp.pop %v1414
    %v1416 = vmul.f32 1.0, %v1415
    %v1418 = vrot.slane %v1363, 2
    %v1420 = vadd.f32 %v361, %v1418
    %v1421 = vxor.u32 %v1420, 2147483648
    %v1422 = vmul.f32 %v1421, 1.442695
    %v1423 = vpow.pop %v1422
    %v1424 = vadd.f32 %v1423, 1.0
    %v1425 = vrcp.pop %v1424
    %v1426 = vmul.f32 1.0, %v1425
    %v1427 = vadd.f32 %v1402, %v437
    %v1429 = vrot.slane %v1427, 2
    %v1431 = vmul.f32 %v1416, %v1429
    %v1432 = vadd.f32 %v400, %v1431
    %v1433 = vtanh.pop %v1432
    %v1435 = vrot.slane %v1433, 1
    %v1437 = vsub.f32 %v1319, %v1435
    %v1439 = vrot.slane %v1437, 7
    %v1441 = vmul.f32 %v1426, %v1439
    %v1442 = vadd.f32 %v1433, %v1441
    %p1443 = scmp.gt.s32.totalorder %s86, 6
    %s1444 = scalar_select %p1443, 1, 0
    %v1445 = vstv %s1444
    %vm1446 = vcmp.eq.s32.totalorder %v1445, 1
    %v1448 = vrot.slane %v1319, 7
    %v1450 = vsel %vm1446, %v1442, %v1448
    %v1451 = vpack.c.bf16 %v1450, %v1450
    %v1453 = vrot.slane %v1451, 3
    %1455 = vmatprep.subr.bf16.mxu0 %v521
    %1456 = vmatpush1.bf16.msra.mxu0 %v520
    %1457 = vmatprep.subr.bf16.mxu0 %v524
    %1458 = vmatpush1.bf16.msra.mxu0 %v523
    %1459 = vmatprep.subr.bf16.mxu0 %v527
    %1460 = vmatpush1.bf16.msra.mxu0 %v526
    %1461 = vmatprep.subr.bf16.mxu0 %v530
    %1462 = vmatpush1.bf16.msra.mxu0 %v529
    %1463 = vmatprep.subr.bf16.mxu0 %v533
    %1464 = vmatpush1.bf16.msra.mxu0 %v532
    %1465 = vmatprep.subr.bf16.mxu0 %v536
    %1466 = vmatpush1.bf16.msra.mxu0 %v535
    %1467 = vmatprep.subr.bf16.mxu0 %v539
    %1468 = vmatpush1.bf16.msra.mxu0 %v538
    %1469 = vmatprep.subr.bf16.mxu0 %v542
    %1470 = vmatpush1.bf16.msra.mxu0 %v541
    %1471 = vmatprep.subr.bf16.mxu0 0
    %1472 = vmatpush1.bf16.msra.mxu0 0
    %1473 = vmatprep.subr.bf16.mxu0 0
    %1474 = vmatpush1.bf16.msra.mxu0 0
    %1475 = vmatprep.subr.bf16.mxu0 0
    %1476 = vmatpush1.bf16.msra.mxu0 0
    %1477 = vmatprep.subr.bf16.mxu0 0
    %1478 = vmatpush1.bf16.msra.mxu0 0
    %1479 = vmatprep.subr.bf16.mxu0 0
    %1480 = vmatpush1.bf16.msra.mxu0 0
    %1481 = vmatprep.subr.bf16.mxu0 0
    %1482 = vmatpush1.bf16.msra.mxu0 0
    %1483 = vmatprep.subr.bf16.mxu0 0
    %1484 = vmatpush1.bf16.msra.mxu0 0
    %1485 = vmatprep.subr.bf16.mxu0 0
    %1486 = vmatpush1.bf16.msra.mxu0 0
    %1487 = vmatprep.mubr.bf16.mxu0 0
    %1488 = vmatmul.mubr.bf16.gmra.mrb[0].mxu0 %v1453
    %v1489 = vpop.f32.mrb[0].mxu0
    %v1490 = vadd.f32 0.0, %v1489
    %v1491 = vpop.f32.mrb[0].mxu0
    %v1492 = vadd.f32 0.0, %v1491
    %v1493 = vpop.f32.mrb[0].mxu0
    %v1494 = vpop.f32.mrb[0].mxu0
    %1495 = vdwg.mxu0
    %1496 = vmatprep.subr.bf16.mxu0 0
    %1497 = vmatpush1.bf16.msra.mxu0 %v522
    %1498 = vmatprep.subr.bf16.mxu0 0
    %1499 = vmatpush1.bf16.msra.mxu0 %v525
    %1500 = vmatprep.subr.bf16.mxu0 0
    %1501 = vmatpush1.bf16.msra.mxu0 %v528
    %1502 = vmatprep.subr.bf16.mxu0 0
    %1503 = vmatpush1.bf16.msra.mxu0 %v531
    %1504 = vmatprep.subr.bf16.mxu0 0
    %1505 = vmatpush1.bf16.msra.mxu0 %v534
    %1506 = vmatprep.subr.bf16.mxu0 0
    %1507 = vmatpush1.bf16.msra.mxu0 %v537
    %1508 = vmatprep.subr.bf16.mxu0 0
    %1509 = vmatpush1.bf16.msra.mxu0 %v540
    %1510 = vmatprep.subr.bf16.mxu0 0
    %1511 = vmatpush1.bf16.msra.mxu0 %v543
    %1512 = vmatprep.subr.bf16.mxu0 0
    %1513 = vmatpush1.bf16.msra.mxu0 0
    %1514 = vmatprep.subr.bf16.mxu0 0
    %1515 = vmatpush1.bf16.msra.mxu0 0
    %1516 = vmatprep.subr.bf16.mxu0 0
    %1517 = vmatpush1.bf16.msra.mxu0 0
    %1518 = vmatprep.subr.bf16.mxu0 0
    %1519 = vmatpush1.bf16.msra.mxu0 0
    %1520 = vmatprep.subr.bf16.mxu0 0
    %1521 = vmatpush1.bf16.msra.mxu0 0
    %1522 = vmatprep.subr.bf16.mxu0 0
    %1523 = vmatpush1.bf16.msra.mxu0 0
    %1524 = vmatprep.subr.bf16.mxu0 0
    %1525 = vmatpush1.bf16.msra.mxu0 0
    %1526 = vmatprep.subr.bf16.mxu0 0
    %1527 = vmatpush1.bf16.msra.mxu0 0
    %1528 = vmatprep.mubr.bf16.mxu0 0
    %1529 = vmatmul.mubr.bf16.gmra.mrb[0].mxu0 %v1453
    %v1530 = vpop.f32.mrb[0].mxu0
    %v1531 = vadd.f32 0.0, %v1530
    %v1532 = vpop.f32.mrb[0].mxu0
    %v1533 = vpop.f32.mrb[0].mxu0
    %v1534 = vpop.f32.mrb[0].mxu0
    %1535 = vdwg.mxu0
    %v1537 = vrot.slane %v1490, 1
    %v1539 = vadd.f32 %v359, %v1537
    %v1540 = vxor.u32 %v1539, 2147483648
    %v1541 = vmul.f32 %v1540, 1.442695
    %v1542 = vpow.pop %v1541
    %v1543 = vadd.f32 %v1542, 1.0
    %v1544 = vrcp.pop %v1543
    %v1545 = vmul.f32 1.0, %v1544
    %v1547 = vrot.slane %v1492, 1
    %v1549 = vadd.f32 %v361, %v1547
    %v1550 = vxor.u32 %v1549, 2147483648
    %v1551 = vmul.f32 %v1550, 1.442695
    %v1552 = vpow.pop %v1551
    %v1553 = vadd.f32 %v1552, 1.0
    %v1554 = vrcp.pop %v1553
    %v1555 = vmul.f32 1.0, %v1554
    %v1556 = vadd.f32 %v1531, %v437
    %v1558 = vrot.slane %v1556, 1
    %v1560 = vmul.f32 %v1545, %v1558
    %v1561 = vadd.f32 %v400, %v1560
    %v1562 = vtanh.pop %v1561
    %v1564 = vrot.slane %v1562, 1
    %v1566 = vsub.f32 %v1450, %v1564
    %v1568 = vrot.slane %v1566, 7
    %v1570 = vmul.f32 %v1555, %v1568
    %v1571 = vadd.f32 %v1562, %v1570
    %p1572 = scmp.gt.s32.totalorder %s86, 7
    %s1573 = scalar_select %p1572, 1, 0
    %v1574 = vstv %s1573
    %vm1575 = vcmp.eq.s32.totalorder %v1574, 1
    %v1577 = vrot.slane %v1450, 7
    %v1579 = vsel %vm1575, %v1571, %v1577
    %v1580 = vsel %vm132, %v674, %v800
    %v1581 = vsel %vm134, %v1580, %v930
    %v1582 = vsel %vm136, %v1581, %v1059
    %v1583 = vsel %vm138, %v1582, %v1190
    %v1584 = vsel %vm140, %v1583, %v1319
    %v1585 = vsel %vm142, %v1584, %v1450
    %v1586 = vsel %vm144, %v1585, %v1579
    %1587 = vst [vmem:[#allocation11] sm:$0xff] %v1586
    // Predicated region
    $region50: #{tpu_custom_call.1} parent=1 // pred_check
      _
    $region51: #{tpu_custom_call.1} parent=1 // pred_check_branch
      %1589 = sbr.rel (0) target = $region53
    $region52: #{tpu_custom_call.1} parent=1 // pred_region
      %s1591 = ssub.s32 128, 128
      %1592 = vsyncadd [#allocation5], %s1591
      %s1594 = sshll.u32 [#allocation11], 4
      %s1595 = int_to_ptr.vmem [resolvable:$true] %s1594
      %1597 = dma.vmem_to_hbm [thread:$0]  %s1595, 128, %s8, [#allocation5]
    $region53: #{tpu_custom_call.1} parent=1 // pred_fallthru
      _
    // Predicated region
    $region54: #{tpu_custom_call.1} parent=1 // pred_check
      _
    $region55: #{tpu_custom_call.1} parent=1 // pred_check_branch
      %1599 = sbr.rel (0) target = $region57
    $region56: #{tpu_custom_call.1} parent=1 // pred_region
      %1600 = dma.done [#allocation5], 128
    $region57: #{tpu_custom_call.1} parent=1 // pred_fallthru
      _
    %1601 = vsyncpa [#allocation4], 1
    %1602 = vsyncpa [#allocation9], 1
    %1603 = vsyncpa [#allocation5], 1
    %1604 = vsyncpa [#allocation6], 1

</llo_original>
